<compile_context>
chip_gen: v6e
topology: v6e:2x2x1
jax: 0.10.0
libtpu: 0.0.40
codegen_flags: <defaults>
</compile_context>

<pallas_src>
import math

import jax
import jax.numpy as jnp
from jax.experimental import pallas as pl
from jax.experimental.pallas import tpu as pltpu  # noqa: F401  (TPU backend helpers)

# ----------------------------- model config (small) --------------------------
BATCH = 2
SEQ = 8                            # num patches
HIDDEN = 32
NUM_HEADS = 2
HEAD_DIM = HIDDEN // NUM_HEADS     # 16
ROPE_THETA = 10000.0
OUT_PAD = 128                      # lane-dense output width (multiple of 128)


# ----------------------------- fused attention kernel ------------------------
def _attention_kernel(x_ref, mask_ref, cos_ref, sin_ref, w_in_ref, wo_ref, o_ref):
    """Single program: whole batch, all heads."""
    H = HIDDEN
    S = SEQ
    D = HEAD_DIM

    x = x_ref[...]                                          # (B*S, H) slab

    # One fused MXU projection -> columns [q | q@R | k | k@R | v] (160 lanes).
    # The 1/sqrt(D) score scale and the RoPE pair-rotation R are already folded
    # into the weight columns host-side.
    fused = jnp.dot(x, w_in_ref[...], preferred_element_type=jnp.float32)

    cos = cos_ref[...]                                      # (B*S, H)
    sin = sin_ref[...]                                      # (B*S, H)

    # Interleaved complex RoPE == t*cos + (t@R)*sin, with t@R coming straight
    # out of the fused projection (no in-kernel rotation matmul / roll).
    # NOTE: at real sizes pack the fused weight columns head-major / 128-lane
    # aligned so these sub-128-lane slices disappear.
    q = fused[:, 0 * H:1 * H] * cos + fused[:, 1 * H:2 * H] * sin
    k = fused[:, 2 * H:3 * H] * cos + fused[:, 3 * H:4 * H] * sin
    v = fused[:, 4 * H:5 * H]

    wo = wo_ref[...]                                        # (H, 128), zero-padded cols

    for b in range(BATCH):                                  # static; 2 iterations
        r0 = b * S
        bias = mask_ref[b]                                  # (S, S) additive mask
        out_b = jnp.zeros((S, OUT_PAD), dtype=jnp.float32)
        # Static head loop is fine at 2 heads; at real Pixtral (16 heads) use
        # lax.fori_loop(..., unroll=True) to bound vreg live ranges.
        for h in range(NUM_HEADS):
            lo = h * D
            qh = q[r0:r0 + S, lo:lo + D]
            kh = k[r0:r0 + S, lo:lo + D]
            vh = v[r0:r0 + S, lo:lo + D]
            # scores = qh @ kh^T (contract last dims; scale already in Wq)
            s = jax.lax.dot_general(qh, kh, (((1,), (1,)), ((), ())),
                                    preferred_element_type=jnp.float32)
            s = s + bias
            s = s - jnp.max(s, axis=-1, keepdims=True)
            p = jnp.exp(s)
            l = jnp.sum(p, axis=-1, keepdims=True)
            oh = jnp.dot(p, vh, preferred_element_type=jnp.float32)       # (S, D)
            # Deferred softmax normalisation: one (S,1) reciprocal instead of an
            # (S,S) divide.  (pl.reciprocal(l, approx=True) would use the idle
            # EUP on hardware; exact here to keep the 1e-3 reference check.)
            oh = oh * (1.0 / l)
            # Output projection folded into the head loop; Wo columns are
            # zero-padded to 128 lanes -> lane-dense accumulation and store.
            out_b = out_b + jnp.dot(oh, wo[lo:lo + D, :],
                                    preferred_element_type=jnp.float32)
        # Full-128-lane, 8-sublane store: unmasked vst.
        o_ref[r0:r0 + S, :] = out_b.astype(o_ref.dtype)


def pixtral_attention(x, mask, cos_half, sin_half, wq, wk, wv, wo):
    """x: [B,S,H]; mask: [B,1,S,S] additive; cos/sin_half: [S, D/2]; w*: [H,H]."""
    B, S, H = x.shape
    D = H // NUM_HEADS
    scale = 1.0 / math.sqrt(D)

    # ---------------- one-time parameter prep (wrapper-side weight algebra) ---
    # Pair-rotation R: (t @ R)[:, 2i] = -t[:, 2i+1], (t @ R)[:, 2i+1] = t[:, 2i].
    rot = jnp.kron(jnp.eye(H // 2, dtype=x.dtype),
                   jnp.array([[0.0, 1.0], [-1.0, 0.0]], dtype=x.dtype))
    wq_s = wq * scale                       # fold softmax scale into Wq (commutes with RoPE)
    w_in = jnp.concatenate([wq_s, wq_s @ rot, wk, wk @ rot, wv], axis=1)   # (H, 5H)
    wo_pad = jnp.pad(wo, ((0, 0), (0, OUT_PAD - H)))                       # (H, 128)

    # RoPE tables expanded to the flattened (B*S, H) activation layout.
    # (At real sizes keep them (S, D) and broadcast in-kernel instead.)
    cos_full = jnp.tile(jnp.repeat(cos_half, 2, axis=1), (B, NUM_HEADS))   # (B*S, H)
    sin_full = jnp.tile(jnp.repeat(sin_half, 2, axis=1), (B, NUM_HEADS))   # (B*S, H)

    x_flat = x.reshape(B * S, H)            # batch stacked along sublanes
    mask_b = mask.reshape(B, S, S)

    out_pad = pl.pallas_call(
        _attention_kernel,
        out_shape=jax.ShapeDtypeStruct((B * S, OUT_PAD), x.dtype),
        grid=(1,),                                           # one fused program
        in_specs=[
            pl.BlockSpec((B * S, H), lambda i: (0, 0)),      # x slab
            pl.BlockSpec((B, S, S), lambda i: (0, 0, 0)),    # additive mask
            pl.BlockSpec((B * S, H), lambda i: (0, 0)),      # cos (resident)
            pl.BlockSpec((B * S, H), lambda i: (0, 0)),      # sin (resident)
            pl.BlockSpec((H, 5 * H), lambda i: (0, 0)),      # fused W_in (resident)
            pl.BlockSpec((H, OUT_PAD), lambda i: (0, 0)),    # padded W_o (resident)
        ],
        out_specs=pl.BlockSpec((B * S, OUT_PAD), lambda i: (0, 0)),
    )(x_flat, mask_b, cos_full, sin_full, w_in, wo_pad)

    # Strip the lane padding and restore [B, S, H].
    return out_pad[:, :H].reshape(B, S, H)


# ----------------------------- pure-JAX reference -----------------------------
def reference_attention(x, mask, cos_half, sin_half, wq, wk, wv, wo):
    B, S, H = x.shape
    q = x @ wq
    k = x @ wk
    v = x @ wv
    q = q.reshape(B, S, NUM_HEADS, HEAD_DIM)
    k = k.reshape(B, S, NUM_HEADS, HEAD_DIM)
    v = v.reshape(B, S, NUM_HEADS, HEAD_DIM)

    def rope(t):  # real-arithmetic equivalent of view_as_complex * freqs_cis
        tr = t.reshape(B, S, NUM_HEADS, HEAD_DIM // 2, 2)
        t0, t1 = tr[..., 0], tr[..., 1]
        c = cos_half[None, :, None, :]
        s = sin_half[None, :, None, :]
        o0 = t0 * c - t1 * s
        o1 = t0 * s + t1 * c
        return jnp.stack([o0, o1], axis=-1).reshape(B, S, NUM_HEADS, HEAD_DIM)

    q, k = rope(q), rope(k)
    qt = q.transpose(0, 2, 1, 3)
    kt = k.transpose(0, 2, 1, 3)
    vt = v.transpose(0, 2, 1, 3)
    scores = jnp.einsum("bhqd,bhkd->bhqk", qt, kt) / math.sqrt(HEAD_DIM) + mask
    p = jax.nn.softmax(scores, axis=-1)
    o = jnp.einsum("bhqk,bhkd->bhqd", p, vt)
    o = o.transpose(0, 2, 1, 3).reshape(B, S, H)
    return o @ wo


# ----------------------------- main --------------------------------------------
if __name__ == "__main__":
    key = jax.random.PRNGKey(0)
    keys = jax.random.split(key, 6)

    x = jax.random.normal(keys[0], (BATCH, SEQ, HIDDEN), dtype=jnp.float32)
    # additive attention bias (SDPA attn_mask semantics, broadcast over heads)
    mask = 0.1 * jax.random.normal(keys[1], (BATCH, 1, SEQ, SEQ), dtype=jnp.float32)

    # rotary position embeddings: angles (S, D/2); freqs_cis = cos + i*sin
    pos = jnp.arange(SEQ, dtype=jnp.float32)
    inv_freq = 1.0 / (ROPE_THETA ** (
        jnp.arange(0, HEAD_DIM, 2, dtype=jnp.float32) / HEAD_DIM))
    angles = pos[:, None] * inv_freq[None, :]                      # (S, D/2)
    cos_half, sin_half = jnp.cos(angles), jnp.sin(angles)

    def init(k, fan_in, shape):
        return jax.random.normal(k, shape, dtype=jnp.float32) / math.sqrt(fan_in)

    wq = init(keys[2], HIDDEN, (HIDDEN, HIDDEN))
    wk = init(keys[3], HIDDEN, (HIDDEN, HIDDEN))
    wv = init(keys[4], HIDDEN, (HIDDEN, HIDDEN))
    wo = init(keys[5], HIDDEN, (HIDDEN, HIDDEN))

    out = pixtral_attention(x, mask, cos_half, sin_half, wq, wk, wv, wo)
    out = jax.block_until_ready(out)

    ref = jax.block_until_ready(
        reference_attention(x, mask, cos_half, sin_half, wq, wk, wv, wo))
    assert out.shape == (BATCH, SEQ, HIDDEN)
    assert jnp.allclose(out, ref, rtol=1e-3, atol=1e-3), (
        float(jnp.max(jnp.abs(out - ref))))
    print("KERNEL_OK")
</pallas_src>

<mosaic_0001>
module attributes {stable_mosaic.version = 11 : i64} {
  func.func @_attention_kernel(%arg0: i32, %arg1: memref<16x32xf32, #tpu.memory_space<vmem>>, %arg2: memref<2x8x8xf32, #tpu.memory_space<vmem>>, %arg3: memref<16x32xf32, #tpu.memory_space<vmem>>, %arg4: memref<16x32xf32, #tpu.memory_space<vmem>>, %arg5: memref<32x160xf32, #tpu.memory_space<vmem>>, %arg6: memref<32x128xf32, #tpu.memory_space<vmem>>, %arg7: memref<16x128xf32, #tpu.memory_space<vmem>>) attributes {dimension_semantics = [#tpu.dimension_semantics<arbitrary>], iteration_bounds = array<i64: 1>, scalar_prefetch = 0 : i64, scratch_operands = 0 : i64, tpu.core_type = #tpu.core_type<tc>, window_params = [{pipeline_mode = #tpu.pipeline_mode<synchronous>, transform_indices = @transform_0, window_bounds = array<i64: 16, 32>}, {pipeline_mode = #tpu.pipeline_mode<synchronous>, transform_indices = @transform_1, window_bounds = array<i64: 2, 8, 8>}, {pipeline_mode = #tpu.pipeline_mode<synchronous>, transform_indices = @transform_2, window_bounds = array<i64: 16, 32>}, {pipeline_mode = #tpu.pipeline_mode<synchronous>, transform_indices = @transform_3, window_bounds = array<i64: 16, 32>}, {pipeline_mode = #tpu.pipeline_mode<synchronous>, transform_indices = @transform_4, window_bounds = array<i64: 32, 160>}, {pipeline_mode = #tpu.pipeline_mode<synchronous>, transform_indices = @transform_5, window_bounds = array<i64: 32, 128>}, {pipeline_mode = #tpu.pipeline_mode<synchronous>, transform_indices = @transform_6, window_bounds = array<i64: 16, 128>}]} {
    %c0 = arith.constant 0 : index
    %c0_0 = arith.constant 0 : index
    %0 = vector.load %arg1[%c0, %c0_0] : memref<16x32xf32, #tpu.memory_space<vmem>>, vector<16x32xf32>
    %c0_1 = arith.constant 0 : index
    %c0_2 = arith.constant 0 : index
    %1 = vector.load %arg5[%c0_1, %c0_2] : memref<32x160xf32, #tpu.memory_space<vmem>>, vector<32x160xf32>
    %cst = arith.constant dense<0.000000e+00> : vector<16x160xf32>
    %2 = tpu.matmul %0, %1, %cst {dimension_numbers = #tpu.dot_dimension_numbers<[1], [0], [0], [1], [0, 0, 1, 1], [], []>} : vector<16x32xf32>, vector<32x160xf32>, vector<16x160xf32> -> vector<16x160xf32>
    %c0_3 = arith.constant 0 : index
    %c0_4 = arith.constant 0 : index
    %3 = vector.load %arg3[%c0_3, %c0_4] : memref<16x32xf32, #tpu.memory_space<vmem>>, vector<16x32xf32>
    %c0_5 = arith.constant 0 : index
    %c0_6 = arith.constant 0 : index
    %4 = vector.load %arg4[%c0_5, %c0_6] : memref<16x32xf32, #tpu.memory_space<vmem>>, vector<16x32xf32>
    %5 = vector.extract_strided_slice %2 {offsets = [0, 0], sizes = [16, 32], strides = [1, 1]} : vector<16x160xf32> to vector<16x32xf32>
    %6 = arith.mulf %5, %3 : vector<16x32xf32>
    %7 = vector.extract_strided_slice %2 {offsets = [0, 32], sizes = [16, 32], strides = [1, 1]} : vector<16x160xf32> to vector<16x32xf32>
    %8 = arith.mulf %7, %4 : vector<16x32xf32>
    %9 = arith.addf %6, %8 : vector<16x32xf32>
    %10 = vector.extract_strided_slice %2 {offsets = [0, 64], sizes = [16, 32], strides = [1, 1]} : vector<16x160xf32> to vector<16x32xf32>
    %11 = arith.mulf %10, %3 : vector<16x32xf32>
    %12 = vector.extract_strided_slice %2 {offsets = [0, 96], sizes = [16, 32], strides = [1, 1]} : vector<16x160xf32> to vector<16x32xf32>
    %13 = arith.mulf %12, %4 : vector<16x32xf32>
    %14 = arith.addf %11, %13 : vector<16x32xf32>
    %15 = vector.extract_strided_slice %2 {offsets = [0, 128], sizes = [16, 32], strides = [1, 1]} : vector<16x160xf32> to vector<16x32xf32>
    %c0_7 = arith.constant 0 : index
    %c0_8 = arith.constant 0 : index
    %16 = vector.load %arg6[%c0_7, %c0_8] : memref<32x128xf32, #tpu.memory_space<vmem>>, vector<32x128xf32>
    %c0_9 = arith.constant 0 : index
    %c0_10 = arith.constant 0 : index
    %c0_11 = arith.constant 0 : index
    %17 = vector.load %arg2[%c0_9, %c0_10, %c0_11] : memref<2x8x8xf32, #tpu.memory_space<vmem>>, vector<1x8x8xf32>
    %18 = vector.shape_cast %17 : vector<1x8x8xf32> to vector<8x8xf32>
    %cst_12 = arith.constant 0.000000e+00 : f32
    %19 = vector.broadcast %cst_12 : f32 to vector<8x128xf32>
    %20 = vector.extract_strided_slice %9 {offsets = [0, 0], sizes = [8, 16], strides = [1, 1]} : vector<16x32xf32> to vector<8x16xf32>
    %21 = vector.extract_strided_slice %14 {offsets = [0, 0], sizes = [8, 16], strides = [1, 1]} : vector<16x32xf32> to vector<8x16xf32>
    %22 = vector.extract_strided_slice %15 {offsets = [0, 0], sizes = [8, 16], strides = [1, 1]} : vector<16x32xf32> to vector<8x16xf32>
    %cst_13 = arith.constant dense<0.000000e+00> : vector<8x8xf32>
    %23 = tpu.matmul %20, %21, %cst_13 {dimension_numbers = #tpu.dot_dimension_numbers<[1], [1], [0], [0], [0, 0, 1, 0], [], []>} : vector<8x16xf32>, vector<8x16xf32>, vector<8x8xf32> -> vector<8x8xf32>
    %24 = arith.addf %23, %18 : vector<8x8xf32>
    %cst_14 = arith.constant dense<0xFF800000> : vector<8xf32>
    %25 = vector.multi_reduction <maximumf>, %24, %cst_14 [1] : vector<8x8xf32> to vector<8xf32>
    %26 = vector.shape_cast %25 : vector<8xf32> to vector<8x1xf32>
    %27 = vector.broadcast %26 : vector<8x1xf32> to vector<8x8xf32>
    %28 = arith.subf %24, %27 : vector<8x8xf32>
    %29 = math.exp %28 : vector<8x8xf32>
    %cst_15 = arith.constant dense<0.000000e+00> : vector<8xf32>
    %30 = vector.multi_reduction <add>, %29, %cst_15 [1] : vector<8x8xf32> to vector<8xf32>
    %31 = vector.shape_cast %30 : vector<8xf32> to vector<8x1xf32>
    %cst_16 = arith.constant dense<0.000000e+00> : vector<8x16xf32>
    %32 = tpu.matmul %29, %22, %cst_16 {dimension_numbers = #tpu.dot_dimension_numbers<[1], [0], [0], [1], [0, 0, 1, 1], [], []>} : vector<8x8xf32>, vector<8x16xf32>, vector<8x16xf32> -> vector<8x16xf32>
    %cst_17 = arith.constant 1.000000e+00 : f32
    %33 = vector.broadcast %cst_17 : f32 to vector<8x1xf32>
    %34 = arith.divf %33, %31 : vector<8x1xf32>
    %35 = vector.broadcast %34 : vector<8x1xf32> to vector<8x16xf32>
    %36 = arith.mulf %32, %35 : vector<8x16xf32>
    %37 = vector.extract_strided_slice %16 {offsets = [0, 0], sizes = [16, 128], strides = [1, 1]} : vector<32x128xf32> to vector<16x128xf32>
    %cst_18 = arith.constant dense<0.000000e+00> : vector<8x128xf32>
    %38 = tpu.matmul %36, %37, %cst_18 {dimension_numbers = #tpu.dot_dimension_numbers<[1], [0], [0], [1], [0, 0, 1, 1], [], []>} : vector<8x16xf32>, vector<16x128xf32>, vector<8x128xf32> -> vector<8x128xf32>
    %39 = arith.addf %19, %38 : vector<8x128xf32>
    %40 = vector.extract_strided_slice %9 {offsets = [0, 16], sizes = [8, 16], strides = [1, 1]} : vector<16x32xf32> to vector<8x16xf32>
    %41 = vector.extract_strided_slice %14 {offsets = [0, 16], sizes = [8, 16], strides = [1, 1]} : vector<16x32xf32> to vector<8x16xf32>
    %42 = vector.extract_strided_slice %15 {offsets = [0, 16], sizes = [8, 16], strides = [1, 1]} : vector<16x32xf32> to vector<8x16xf32>
    %cst_19 = arith.constant dense<0.000000e+00> : vector<8x8xf32>
    %43 = tpu.matmul %40, %41, %cst_19 {dimension_numbers = #tpu.dot_dimension_numbers<[1], [1], [0], [0], [0, 0, 1, 0], [], []>} : vector<8x16xf32>, vector<8x16xf32>, vector<8x8xf32> -> vector<8x8xf32>
    %44 = arith.addf %43, %18 : vector<8x8xf32>
    %cst_20 = arith.constant dense<0xFF800000> : vector<8xf32>
    %45 = vector.multi_reduction <maximumf>, %44, %cst_20 [1] : vector<8x8xf32> to vector<8xf32>
    %46 = vector.shape_cast %45 : vector<8xf32> to vector<8x1xf32>
    %47 = vector.broadcast %46 : vector<8x1xf32> to vector<8x8xf32>
    %48 = arith.subf %44, %47 : vector<8x8xf32>
    %49 = math.exp %48 : vector<8x8xf32>
    %cst_21 = arith.constant dense<0.000000e+00> : vector<8xf32>
    %50 = vector.multi_reduction <add>, %49, %cst_21 [1] : vector<8x8xf32> to vector<8xf32>
    %51 = vector.shape_cast %50 : vector<8xf32> to vector<8x1xf32>
    %cst_22 = arith.constant dense<0.000000e+00> : vector<8x16xf32>
    %52 = tpu.matmul %49, %42, %cst_22 {dimension_numbers = #tpu.dot_dimension_numbers<[1], [0], [0], [1], [0, 0, 1, 1], [], []>} : vector<8x8xf32>, vector<8x16xf32>, vector<8x16xf32> -> vector<8x16xf32>
    %cst_23 = arith.constant 1.000000e+00 : f32
    %53 = vector.broadcast %cst_23 : f32 to vector<8x1xf32>
    %54 = arith.divf %53, %51 : vector<8x1xf32>
    %55 = vector.broadcast %54 : vector<8x1xf32> to vector<8x16xf32>
    %56 = arith.mulf %52, %55 : vector<8x16xf32>
    %57 = vector.extract_strided_slice %16 {offsets = [16, 0], sizes = [16, 128], strides = [1, 1]} : vector<32x128xf32> to vector<16x128xf32>
    %cst_24 = arith.constant dense<0.000000e+00> : vector<8x128xf32>
    %58 = tpu.matmul %56, %57, %cst_24 {dimension_numbers = #tpu.dot_dimension_numbers<[1], [0], [0], [1], [0, 0, 1, 1], [], []>} : vector<8x16xf32>, vector<16x128xf32>, vector<8x128xf32> -> vector<8x128xf32>
    %59 = arith.addf %39, %58 : vector<8x128xf32>
    %c0_25 = arith.constant 0 : index
    %c0_26 = arith.constant 0 : index
    %60 = vector.load %arg7[%c0_25, %c0_26] : memref<16x128xf32, #tpu.memory_space<vmem>>, vector<8x128xf32>
    tpu.vector_store %arg7[%c0_25, %c0_26], %59 {strides = array<i32>} : memref<16x128xf32, #tpu.memory_space<vmem>>, vector<8x128xf32>,
    %c1 = arith.constant 1 : index
    %c0_27 = arith.constant 0 : index
    %c0_28 = arith.constant 0 : index
    %61 = vector.load %arg2[%c1, %c0_27, %c0_28] : memref<2x8x8xf32, #tpu.memory_space<vmem>>, vector<1x8x8xf32>
    %62 = vector.shape_cast %61 : vector<1x8x8xf32> to vector<8x8xf32>
    %cst_29 = arith.constant 0.000000e+00 : f32
    %63 = vector.broadcast %cst_29 : f32 to vector<8x128xf32>
    %64 = vector.extract_strided_slice %9 {offsets = [8, 0], sizes = [8, 16], strides = [1, 1]} : vector<16x32xf32> to vector<8x16xf32>
    %65 = vector.extract_strided_slice %14 {offsets = [8, 0], sizes = [8, 16], strides = [1, 1]} : vector<16x32xf32> to vector<8x16xf32>
    %66 = vector.extract_strided_slice %15 {offsets = [8, 0], sizes = [8, 16], strides = [1, 1]} : vector<16x32xf32> to vector<8x16xf32>
    %cst_30 = arith.constant dense<0.000000e+00> : vector<8x8xf32>
    %67 = tpu.matmul %64, %65, %cst_30 {dimension_numbers = #tpu.dot_dimension_numbers<[1], [1], [0], [0], [0, 0, 1, 0], [], []>} : vector<8x16xf32>, vector<8x16xf32>, vector<8x8xf32> -> vector<8x8xf32>
    %68 = arith.addf %67, %62 : vector<8x8xf32>
    %cst_31 = arith.constant dense<0xFF800000> : vector<8xf32>
    %69 = vector.multi_reduction <maximumf>, %68, %cst_31 [1] : vector<8x8xf32> to vector<8xf32>
    %70 = vector.shape_cast %69 : vector<8xf32> to vector<8x1xf32>
    %71 = vector.broadcast %70 : vector<8x1xf32> to vector<8x8xf32>
    %72 = arith.subf %68, %71 : vector<8x8xf32>
    %73 = math.exp %72 : vector<8x8xf32>
    %cst_32 = arith.constant dense<0.000000e+00> : vector<8xf32>
    %74 = vector.multi_reduction <add>, %73, %cst_32 [1] : vector<8x8xf32> to vector<8xf32>
    %75 = vector.shape_cast %74 : vector<8xf32> to vector<8x1xf32>
    %cst_33 = arith.constant dense<0.000000e+00> : vector<8x16xf32>
    %76 = tpu.matmul %73, %66, %cst_33 {dimension_numbers = #tpu.dot_dimension_numbers<[1], [0], [0], [1], [0, 0, 1, 1], [], []>} : vector<8x8xf32>, vector<8x16xf32>, vector<8x16xf32> -> vector<8x16xf32>
    %cst_34 = arith.constant 1.000000e+00 : f32
    %77 = vector.broadcast %cst_34 : f32 to vector<8x1xf32>
    %78 = arith.divf %77, %75 : vector<8x1xf32>
    %79 = vector.broadcast %78 : vector<8x1xf32> to vector<8x16xf32>
    %80 = arith.mulf %76, %79 : vector<8x16xf32>
    %81 = vector.extract_strided_slice %16 {offsets = [0, 0], sizes = [16, 128], strides = [1, 1]} : vector<32x128xf32> to vector<16x128xf32>
    %cst_35 = arith.constant dense<0.000000e+00> : vector<8x128xf32>
    %82 = tpu.matmul %80, %81, %cst_35 {dimension_numbers = #tpu.dot_dimension_numbers<[1], [0], [0], [1], [0, 0, 1, 1], [], []>} : vector<8x16xf32>, vector<16x128xf32>, vector<8x128xf32> -> vector<8x128xf32>
    %83 = arith.addf %63, %82 : vector<8x128xf32>
    %84 = vector.extract_strided_slice %9 {offsets = [8, 16], sizes = [8, 16], strides = [1, 1]} : vector<16x32xf32> to vector<8x16xf32>
    %85 = vector.extract_strided_slice %14 {offsets = [8, 16], sizes = [8, 16], strides = [1, 1]} : vector<16x32xf32> to vector<8x16xf32>
    %86 = vector.extract_strided_slice %15 {offsets = [8, 16], sizes = [8, 16], strides = [1, 1]} : vector<16x32xf32> to vector<8x16xf32>
    %cst_36 = arith.constant dense<0.000000e+00> : vector<8x8xf32>
    %87 = tpu.matmul %84, %85, %cst_36 {dimension_numbers = #tpu.dot_dimension_numbers<[1], [1], [0], [0], [0, 0, 1, 0], [], []>} : vector<8x16xf32>, vector<8x16xf32>, vector<8x8xf32> -> vector<8x8xf32>
    %88 = arith.addf %87, %62 : vector<8x8xf32>
    %cst_37 = arith.constant dense<0xFF800000> : vector<8xf32>
    %89 = vector.multi_reduction <maximumf>, %88, %cst_37 [1] : vector<8x8xf32> to vector<8xf32>
    %90 = vector.shape_cast %89 : vector<8xf32> to vector<8x1xf32>
    %91 = vector.broadcast %90 : vector<8x1xf32> to vector<8x8xf32>
    %92 = arith.subf %88, %91 : vector<8x8xf32>
    %93 = math.exp %92 : vector<8x8xf32>
    %cst_38 = arith.constant dense<0.000000e+00> : vector<8xf32>
    %94 = vector.multi_reduction <add>, %93, %cst_38 [1] : vector<8x8xf32> to vector<8xf32>
    %95 = vector.shape_cast %94 : vector<8xf32> to vector<8x1xf32>
    %cst_39 = arith.constant dense<0.000000e+00> : vector<8x16xf32>
    %96 = tpu.matmul %93, %86, %cst_39 {dimension_numbers = #tpu.dot_dimension_numbers<[1], [0], [0], [1], [0, 0, 1, 1], [], []>} : vector<8x8xf32>, vector<8x16xf32>, vector<8x16xf32> -> vector<8x16xf32>
    %cst_40 = arith.constant 1.000000e+00 : f32
    %97 = vector.broadcast %cst_40 : f32 to vector<8x1xf32>
    %98 = arith.divf %97, %95 : vector<8x1xf32>
    %99 = vector.broadcast %98 : vector<8x1xf32> to vector<8x16xf32>
    %100 = arith.mulf %96, %99 : vector<8x16xf32>
    %101 = vector.extract_strided_slice %16 {offsets = [16, 0], sizes = [16, 128], strides = [1, 1]} : vector<32x128xf32> to vector<16x128xf32>
    %cst_41 = arith.constant dense<0.000000e+00> : vector<8x128xf32>
    %102 = tpu.matmul %100, %101, %cst_41 {dimension_numbers = #tpu.dot_dimension_numbers<[1], [0], [0], [1], [0, 0, 1, 1], [], []>} : vector<8x16xf32>, vector<16x128xf32>, vector<8x128xf32> -> vector<8x128xf32>
    %103 = arith.addf %83, %102 : vector<8x128xf32>
    %c8 = arith.constant 8 : index
    %c0_42 = arith.constant 0 : index
    %104 = vector.load %arg7[%c8, %c0_42] : memref<16x128xf32, #tpu.memory_space<vmem>>, vector<8x128xf32>
    tpu.vector_store %arg7[%c8, %c0_42], %103 {strides = array<i32>} : memref<16x128xf32, #tpu.memory_space<vmem>>, vector<8x128xf32>,
    return
  }
  func.func @transform_0(%arg0: i32) -> (i32, i32) {
    %c0_i32 = arith.constant 0 : i32
    %c0_i32_0 = arith.constant 0 : i32
    %c0_i32_1 = arith.constant 0 : i32
    return %c0_i32, %c0_i32_0 : i32, i32
  }
  func.func @transform_1(%arg0: i32) -> (i32, i32, i32) {
    %c0_i32 = arith.constant 0 : i32
    %c0_i32_0 = arith.constant 0 : i32
    %c0_i32_1 = arith.constant 0 : i32
    %c0_i32_2 = arith.constant 0 : i32
    return %c0_i32, %c0_i32_0, %c0_i32_1 : i32, i32, i32
  }
  func.func @transform_2(%arg0: i32) -> (i32, i32) {
    %c0_i32 = arith.constant 0 : i32
    %c0_i32_0 = arith.constant 0 : i32
    %c0_i32_1 = arith.constant 0 : i32
    return %c0_i32, %c0_i32_0 : i32, i32
  }
  func.func @transform_3(%arg0: i32) -> (i32, i32) {
    %c0_i32 = arith.constant 0 : i32
    %c0_i32_0 = arith.constant 0 : i32
    %c0_i32_1 = arith.constant 0 : i32
    return %c0_i32, %c0_i32_0 : i32, i32
  }
  func.func @transform_4(%arg0: i32) -> (i32, i32) {
    %c0_i32 = arith.constant 0 : i32
    %c0_i32_0 = arith.constant 0 : i32
    %c0_i32_1 = arith.constant 0 : i32
    return %c0_i32, %c0_i32_0 : i32, i32
  }
  func.func @transform_5(%arg0: i32) -> (i32, i32) {
    %c0_i32 = arith.constant 0 : i32
    %c0_i32_0 = arith.constant 0 : i32
    %c0_i32_1 = arith.constant 0 : i32
    return %c0_i32, %c0_i32_0 : i32, i32
  }
  func.func @transform_6(%arg0: i32) -> (i32, i32) {
    %c0_i32 = arith.constant 0 : i32
    %c0_i32_0 = arith.constant 0 : i32
    %c0_i32_1 = arith.constant 0 : i32
    return %c0_i32, %c0_i32_0 : i32, i32
  }
}

</mosaic_0001>

<llo_original>
// kernel: tpu_custom_call.1
$region0: #{tpu_custom_call.1}
  #allocation0 [shape = 'u32[]', space=smem, size = 0x4, offset = 0x4, fixed_abs, tag = 'smem constant byte address 0x4 - core index']
  #allocation1 [shape = 'u32[144,128]{1,0:T(1,128)}', space=vmem, size = 0x12000, scoped, tag = 'internal scratch']
  %s0 = inlined_call_operand.hbm [shape: f32[16,32], index: 0, kind: input, shape index: {}]
  %s1 = inlined_call_operand.hbm [shape: f32[2,8,8], index: 1, kind: input, shape index: {}]
  %s2 = inlined_call_operand.hbm [shape: f32[16,32], index: 2, kind: input, shape index: {}]
  %s3 = inlined_call_operand.hbm [shape: f32[16,32], index: 3, kind: input, shape index: {}]
  %s4 = inlined_call_operand.hbm [shape: f32[32,160], index: 4, kind: input, shape index: {}]
  %s5 = inlined_call_operand.hbm [shape: f32[32,128], index: 5, kind: input, shape index: {}]
  %s6 = inlined_call_operand.hbm [shape: f32[16,128], index: 6, kind: output, shape index: {}]
  %s7 = sld [smem:[#allocation0]]
  $region58: #{tpu_custom_call.1} parent=0
    _
  %s9 = ssub.s32 1, %s7
  %s10 = scalar_select 0, %s9, %s7
  $region1: #{tpu_custom_call.1} parent=0
    #allocation2 [shape = 'u8[8192]{0}', space=vmem, size = 0x2000, scoped, tag = 'input window, operand 0, single buffered']
    #allocation3 [shape = 's32[1]{0}', space=sflag, size = 0x4, scoped, tag = 'scoped memory for tpu_custom_call.1']
    #allocation4 [shape = 's32[1]{0}', space=sflag, size = 0x4, scoped, tag = 'scoped memory for tpu_custom_call.1']
    #allocation5 [shape = 'u8[8192]{0}', space=vmem, size = 0x2000, scoped, tag = 'input window, operand 1, single buffered']
    #allocation6 [shape = 's32[1]{0}', space=sflag, size = 0x4, scoped, tag = 'scoped memory for tpu_custom_call.1']
    #allocation7 [shape = 'u8[8192]{0}', space=vmem, size = 0x2000, scoped, tag = 'input window, operand 2, single buffered']
    #allocation8 [shape = 'u8[8192]{0}', space=vmem, size = 0x2000, scoped, tag = 'input window, operand 3, single buffered']
    #allocation9 [shape = 's32[1]{0}', space=sflag, size = 0x4, scoped, tag = 'scoped memory for tpu_custom_call.1']
    #allocation10 [shape = 'u8[32768]{0}', space=vmem, size = 0x8000, scoped, tag = 'input window, operand 4, single buffered']
    #allocation11 [shape = 'u8[16384]{0}', space=vmem, size = 0x4000, scoped, tag = 'input window, operand 5, single buffered']
    #allocation12 [shape = 's32[1]{0}', space=sflag, size = 0x4, scoped, tag = 'scoped memory for tpu_custom_call.1']
    #allocation13 [shape = 'u8[8192]{0}', space=vmem, size = 0x2000, scoped, tag = 'output window, operand 0, single buffered']
    %11 = vsyncpa [#allocation3], 0
    %12 = vsyncpa [#allocation6], 0
    %13 = vsyncpa [#allocation9], 0
    %14 = vsyncpa [#allocation12], 0
    %15 = vsyncpa [#allocation4], 0
    // Predicated region
    $region2: #{tpu_custom_call.1} parent=1 // pred_check
      _
    $region3: #{tpu_custom_call.1} parent=1 // pred_check_branch
      %17 = sbr.rel (0) target = $region5
    $region4: #{tpu_custom_call.1} parent=1 // pred_region
      %s19 = ssub.s32 256, 256
      %20 = vsyncadd [#allocation3], %s19
      %s21 = sshll.u32 [#allocation2], 4
      %s22 = int_to_ptr.vmem [resolvable:$true] %s21
      %27 = dma.hbm_to_vmem [thread:$0]  %s0, 256, %s22, [#allocation3], 128, 128, 8
    $region5: #{tpu_custom_call.1} parent=1 // pred_fallthru
      _
    // Predicated region
    $region6: #{tpu_custom_call.1} parent=1 // pred_check
      _
    $region7: #{tpu_custom_call.1} parent=1 // pred_check_branch
      %29 = sbr.rel (0) target = $region9
    $region8: #{tpu_custom_call.1} parent=1 // pred_region
      %s31 = ssub.s32 256, 256
      %32 = vsyncadd [#allocation6], %s31
      %s33 = sshll.u32 [#allocation5], 4
      %s34 = int_to_ptr.vmem [resolvable:$true] %s33
      %39 = dma.hbm_to_vmem [thread:$0]  %s1, 256, %s34, [#allocation6], 128, 128, 8
    $region9: #{tpu_custom_call.1} parent=1 // pred_fallthru
      _
    // Predicated region
    $region10: #{tpu_custom_call.1} parent=1 // pred_check
      _
    $region11: #{tpu_custom_call.1} parent=1 // pred_check_branch
      %41 = sbr.rel (0) target = $region13
    $region12: #{tpu_custom_call.1} parent=1 // pred_region
      %s43 = ssub.s32 256, 256
      %44 = vsyncadd [#allocation6], %s43
      %s45 = sshll.u32 [#allocation7], 4
      %s46 = int_to_ptr.vmem [resolvable:$true] %s45
      %51 = dma.hbm_to_vmem [thread:$0]  %s2, 256, %s46, [#allocation6], 128, 128, 8
    $region13: #{tpu_custom_call.1} parent=1 // pred_fallthru
      _
    // Predicated region
    $region14: #{tpu_custom_call.1} parent=1 // pred_check
      _
    $region15: #{tpu_custom_call.1} parent=1 // pred_check_branch
      %53 = sbr.rel (0) target = $region17
    $region16: #{tpu_custom_call.1} parent=1 // pred_region
      %s55 = ssub.s32 256, 256
      %56 = vsyncadd [#allocation9], %s55
      %s57 = sshll.u32 [#allocation8], 4
      %s58 = int_to_ptr.vmem [resolvable:$true] %s57
      %63 = dma.hbm_to_vmem [thread:$0]  %s3, 256, %s58, [#allocation9], 128, 128, 8
    $region17: #{tpu_custom_call.1} parent=1 // pred_fallthru
      _
    // Predicated region
    $region18: #{tpu_custom_call.1} parent=1 // pred_check
      _
    $region19: #{tpu_custom_call.1} parent=1 // pred_check_branch
      %65 = sbr.rel (0) target = $region21
    $region20: #{tpu_custom_call.1} parent=1 // pred_region
      %s67 = ssub.s32 1024, 1024
      %68 = vsyncadd [#allocation9], %s67
      %s69 = sshll.u32 [#allocation10], 4
      %s70 = int_to_ptr.vmem [resolvable:$true] %s69
      %75 = dma.hbm_to_vmem [thread:$0]  %s4, 1024, %s70, [#allocation9], 256, 256, 16
    $region21: #{tpu_custom_call.1} parent=1 // pred_fallthru
      _
    // Predicated region
    $region22: #{tpu_custom_call.1} parent=1 // pred_check
      _
    $region23: #{tpu_custom_call.1} parent=1 // pred_check_branch
      %77 = sbr.rel (0) target = $region25
    $region24: #{tpu_custom_call.1} parent=1 // pred_region
      %s79 = ssub.s32 512, 512
      %80 = vsyncadd [#allocation12], %s79
      %s81 = sshll.u32 [#allocation11], 4
      %s82 = int_to_ptr.vmem [resolvable:$true] %s81
      %87 = dma.hbm_to_vmem [thread:$0]  %s5, 512, %s82, [#allocation12], 128, 128, 8
    $region25: #{tpu_custom_call.1} parent=1 // pred_fallthru
      _
    // Predicated region
    $region26: #{tpu_custom_call.1} parent=1 // pred_check
      _
    $region27: #{tpu_custom_call.1} parent=1 // pred_check_branch
      %89 = sbr.rel (0) target = $region29
    $region28: #{tpu_custom_call.1} parent=1 // pred_region
      %90 = dma.done [#allocation3], 256
    $region29: #{tpu_custom_call.1} parent=1 // pred_fallthru
      _
    // Predicated region
    $region30: #{tpu_custom_call.1} parent=1 // pred_check
      _
    $region31: #{tpu_custom_call.1} parent=1 // pred_check_branch
      %92 = sbr.rel (0) target = $region33
    $region32: #{tpu_custom_call.1} parent=1 // pred_region
      %93 = dma.done [#allocation6], 256
    $region33: #{tpu_custom_call.1} parent=1 // pred_fallthru
      _
    // Predicated region
    $region34: #{tpu_custom_call.1} parent=1 // pred_check
      _
    $region35: #{tpu_custom_call.1} parent=1 // pred_check_branch
      %95 = sbr.rel (0) target = $region37
    $region36: #{tpu_custom_call.1} parent=1 // pred_region
      %96 = dma.done [#allocation6], 256
    $region37: #{tpu_custom_call.1} parent=1 // pred_fallthru
      _
    // Predicated region
    $region38: #{tpu_custom_call.1} parent=1 // pred_check
      _
    $region39: #{tpu_custom_call.1} parent=1 // pred_check_branch
      %98 = sbr.rel (0) target = $region41
    $region40: #{tpu_custom_call.1} parent=1 // pred_region
      %99 = dma.done [#allocation9], 256
    $region41: #{tpu_custom_call.1} parent=1 // pred_fallthru
      _
    // Predicated region
    $region42: #{tpu_custom_call.1} parent=1 // pred_check
      _
    $region43: #{tpu_custom_call.1} parent=1 // pred_check_branch
      %101 = sbr.rel (0) target = $region45
    $region44: #{tpu_custom_call.1} parent=1 // pred_region
      %102 = dma.done [#allocation9], 1024
    $region45: #{tpu_custom_call.1} parent=1 // pred_fallthru
      _
    // Predicated region
    $region46: #{tpu_custom_call.1} parent=1 // pred_check
      _
    $region47: #{tpu_custom_call.1} parent=1 // pred_check_branch
      %104 = sbr.rel (0) target = $region49
    $region48: #{tpu_custom_call.1} parent=1 // pred_region
      %105 = dma.done [#allocation12], 512
    $region49: #{tpu_custom_call.1} parent=1 // pred_fallthru
      _
    %v106 = vld [vmem:[#allocation2] sm:$0xff]
    %v107 = vld [vmem:[#allocation2 + $0x8] sm:$0xff]
    %v108 = vld [vmem:[#allocation10] sm:$0xff]
    %v109 = vld [vmem:[#allocation10 + $0x8] sm:$0xff]
    %v110 = vld [vmem:[#allocation10 + $0x10] sm:$0xff]
    %v111 = vld [vmem:[#allocation10 + $0x18] sm:$0xff]
    %v112 = vld [vmem:[#allocation10 + $0x20] sm:$0xff]
    %v113 = vld [vmem:[#allocation10 + $0x28] sm:$0xff]
    %v114 = vld [vmem:[#allocation10 + $0x30] sm:$0xff]
    %v115 = vld [vmem:[#allocation10 + $0x38] sm:$0xff]
    %vm116 = vcmask 261120
    %v118 = vsel %vm116, %v106, 0
    %v121 = vsel %vm116, %v107, 0
    %123 = vmatprep.subr.mxu0 0.0
    %124 = vmatpush1.msra.mxu0 0.0
    %125 = vmatprep.subr.mxu0 0.0
    %126 = vmatpush1.msra.mxu0 0.0
    %127 = vmatprep.subr.mxu0 0.0
    %128 = vmatpush1.msra.mxu0 0.0
    %129 = vmatprep.subr.mxu0 0.0
    %130 = vmatpush1.msra.mxu0 0.0
    %131 = vmatprep.subr.mxu0 0.0
    %132 = vmatpush1.msra.mxu0 0.0
    %133 = vmatprep.subr.mxu0 0.0
    %134 = vmatpush1.msra.mxu0 0.0
    %135 = vmatprep.subr.mxu0 0.0
    %136 = vmatpush1.msra.mxu0 0.0
    %137 = vmatprep.subr.mxu0 0.0
    %138 = vmatpush1.msra.mxu0 0.0
    %139 = vmatprep.subr.mxu0 0.0
    %140 = vmatpush1.msra.mxu0 0.0
    %141 = vmatprep.subr.mxu0 0.0
    %142 = vmatpush1.msra.mxu0 0.0
    %143 = vmatprep.subr.mxu0 0.0
    %144 = vmatpush1.msra.mxu0 0.0
    %145 = vmatprep.subr.mxu0 0.0
    %146 = vmatpush1.msra.mxu0 0.0
    %147 = vmatprep.subr.mxu0 %v115
    %148 = vmatpush1.msra.mxu0 %v114
    %149 = vmatprep.subr.mxu0 %v113
    %150 = vmatpush1.msra.mxu0 %v112
    %151 = vmatprep.subr.mxu0 %v111
    %152 = vmatpush1.msra.mxu0 %v110
    %153 = vmatprep.subr.mxu0 %v109
    %154 = vmatpush1.msra.mxu0 %v108
    %155 = vmatprep.subr.mxu0 0.0
    %156 = vmatpush2.msra.mxu0 0.0
    %157 = vmatprep.subr.mxu0 0.0
    %158 = vmatpush2.msra.mxu0 0.0
    %159 = vmatprep.subr.mxu0 0.0
    %160 = vmatpush2.msra.mxu0 0.0
    %161 = vmatprep.subr.mxu0 0.0
    %162 = vmatpush2.msra.mxu0 0.0
    %163 = vmatprep.subr.mxu0 0.0
    %164 = vmatpush2.msra.mxu0 0.0
    %165 = vmatprep.subr.mxu0 0.0
    %166 = vmatpush2.msra.mxu0 0.0
    %167 = vmatprep.subr.mxu0 0.0
    %168 = vmatpush2.msra.mxu0 0.0
    %169 = vmatprep.subr.mxu0 0.0
    %170 = vmatpush2.msra.mxu0 0.0
    %171 = vmatprep.subr.mxu0 0.0
    %172 = vmatpush2.msra.mxu0 0.0
    %173 = vmatprep.subr.mxu0 0.0
    %174 = vmatpush2.msra.mxu0 0.0
    %175 = vmatprep.subr.mxu0 0.0
    %176 = vmatpush2.msra.mxu0 0.0
    %177 = vmatprep.subr.mxu0 0.0
    %178 = vmatpush2.msra.mxu0 0.0
    %179 = vmatprep.subr.mxu0 0.0
    %180 = vmatpush2.msra.mxu0 0.0
    %181 = vmatprep.subr.mxu0 0.0
    %182 = vmatpush2.msra.mxu0 0.0
    %183 = vmatprep.subr.mxu0 0.0
    %184 = vmatpush2.msra.mxu0 0.0
    %185 = vmatprep.subr.mxu0 0.0
    %186 = vmatpush2.msra.mxu0 0.0
    %187 = vmatprep.mubr.f32.mxu0 0.0
    %188 = vmatmul.mubr.f32.gmra.mxu0 %v118
    %v189 = vpop.f32.mrf.mxu0
    %v190 = vadd.f32 0.0, %v189
    %v191 = vpop.f32.mrf.mxu0
    %v192 = vadd.f32 0.0, %v191
    %193 = vmatprep.mubr.f32.mxu0 0.0
    %194 = vmatmul.mubr.f32.gmra.mxu0 %v121
    %v195 = vpop.f32.mrf.mxu0
    %v196 = vadd.f32 0.0, %v195
    %v197 = vpop.f32.mrf.mxu0
    %v198 = vadd.f32 0.0, %v197
    %199 = vdwg.mxu0
    %v200 = vld [vmem:[#allocation7] sm:$0xff]
    %v201 = vld [vmem:[#allocation7 + $0x8] sm:$0xff]
    %v202 = vld [vmem:[#allocation8] sm:$0xff]
    %v203 = vld [vmem:[#allocation8 + $0x8] sm:$0xff]
    %v204 = vmul.f32 %v190, %v200
    %v205 = vmul.f32 %v196, %v201
    %208 = vrot.lane.b32.xlu0 %v202, 32
    %v209 = vpop.permute.xlu0 %208
    %210 = vrot.lane.b32.xlu0 %v203, 32
    %v211 = vpop.permute.xlu0 %210
    %v214 = vmul.f32 %v190, %v209
    %v215 = vmul.f32 %v196, %v211
    %218 = vrot.lane.b32.xlu0 %v214, 96
    %v219 = vpop.permute.xlu0 %218
    %220 = vrot.lane.b32.xlu0 %v215, 96
    %v221 = vpop.permute.xlu0 %220
    %v224 = vadd.f32 %v204, %v219
    %v225 = vadd.f32 %v205, %v221
    %228 = vrot.lane.b32.xlu0 %v200, 64
    %v229 = vpop.permute.xlu0 %228
    %230 = vrot.lane.b32.xlu0 %v201, 64
    %v231 = vpop.permute.xlu0 %230
    %v234 = vmul.f32 %v190, %v229
    %v235 = vmul.f32 %v196, %v231
    %236 = vrot.lane.b32.xlu0 %v202, 96
    %v237 = vpop.permute.xlu0 %236
    %238 = vrot.lane.b32.xlu0 %v203, 96
    %v239 = vpop.permute.xlu0 %238
    %v242 = vmul.f32 %v190, %v237
    %v243 = vmul.f32 %v196, %v239
    %246 = vrot.lane.b32.xlu0 %v242, 96
    %v247 = vpop.permute.xlu0 %246
    %248 = vrot.lane.b32.xlu0 %v243, 96
    %v249 = vpop.permute.xlu0 %248
    %v252 = vadd.f32 %v234, %v247
    %v253 = vadd.f32 %v235, %v249
    %v254 = vld [vmem:[#allocation11] sm:$0xff]
    %v255 = vld [vmem:[#allocation11 + $0x8] sm:$0xff]
    %v256 = vld [vmem:[#allocation11 + $0x10] sm:$0xff]
    %v257 = vld [vmem:[#allocation11 + $0x18] sm:$0xff]
    %v258 = vld [vmem:[#allocation5] sm:$0xff]
    %260 = vrot.lane.b32.xlu0 %v252, 64
    %v261 = vpop.permute.xlu0 %260
    %vm262 = vcmask 130048
    %v264 = vsel %vm262, %v224, 0
    %v266 = vsel %vm262, %v261, 0
    %268 = vmatprep.subr.mxu0 0.0
    %269 = vmatpush1.xpose.msra.mxu0 0.0
    %270 = vmatprep.subr.mxu0 0.0
    %271 = vmatpush1.xpose.msra.mxu0 0.0
    %272 = vmatprep.subr.mxu0 0.0
    %273 = vmatpush1.xpose.msra.mxu0 0.0
    %274 = vmatprep.subr.mxu0 0.0
    %275 = vmatpush1.xpose.msra.mxu0 0.0
    %276 = vmatprep.subr.mxu0 0.0
    %277 = vmatpush1.xpose.msra.mxu0 0.0
    %278 = vmatprep.subr.mxu0 0.0
    %279 = vmatpush1.xpose.msra.mxu0 0.0
    %280 = vmatprep.subr.mxu0 0.0
    %281 = vmatpush1.xpose.msra.mxu0 0.0
    %282 = vmatprep.subr.mxu0 0.0
    %283 = vmatpush1.xpose.msra.mxu0 0.0
    %284 = vmatprep.subr.mxu0 0.0
    %285 = vmatpush1.xpose.msra.mxu0 0.0
    %286 = vmatprep.subr.mxu0 0.0
    %287 = vmatpush1.xpose.msra.mxu0 0.0
    %288 = vmatprep.subr.mxu0 0.0
    %289 = vmatpush1.xpose.msra.mxu0 0.0
    %290 = vmatprep.subr.mxu0 0.0
    %291 = vmatpush1.xpose.msra.mxu0 0.0
    %292 = vmatprep.subr.mxu0 0.0
    %293 = vmatpush1.xpose.msra.mxu0 0.0
    %294 = vmatprep.subr.mxu0 0.0
    %295 = vmatpush1.xpose.msra.mxu0 0.0
    %296 = vmatprep.subr.mxu0 0.0
    %297 = vmatpush1.xpose.msra.mxu0 0.0
    %298 = vmatprep.subr.mxu0 0.0
    %299 = vmatpush1.xpose.msra.mxu0 %v266
    %300 = vmatprep.subr.mxu0 0.0
    %301 = vmatpush2.xpose.msra.mxu0 0.0
    %302 = vmatprep.subr.mxu0 0.0
    %303 = vmatpush2.xpose.msra.mxu0 0.0
    %304 = vmatprep.subr.mxu0 0.0
    %305 = vmatpush2.xpose.msra.mxu0 0.0
    %306 = vmatprep.subr.mxu0 0.0
    %307 = vmatpush2.xpose.msra.mxu0 0.0
    %308 = vmatprep.subr.mxu0 0.0
    %309 = vmatpush2.xpose.msra.mxu0 0.0
    %310 = vmatprep.subr.mxu0 0.0
    %311 = vmatpush2.xpose.msra.mxu0 0.0
    %312 = vmatprep.subr.mxu0 0.0
    %313 = vmatpush2.xpose.msra.mxu0 0.0
    %314 = vmatprep.subr.mxu0 0.0
    %315 = vmatpush2.xpose.msra.mxu0 0.0
    %316 = vmatprep.subr.mxu0 0.0
    %317 = vmatpush2.xpose.msra.mxu0 0.0
    %318 = vmatprep.subr.mxu0 0.0
    %319 = vmatpush2.xpose.msra.mxu0 0.0
    %320 = vmatprep.subr.mxu0 0.0
    %321 = vmatpush2.xpose.msra.mxu0 0.0
    %322 = vmatprep.subr.mxu0 0.0
    %323 = vmatpush2.xpose.msra.mxu0 0.0
    %324 = vmatprep.subr.mxu0 0.0
    %325 = vmatpush2.xpose.msra.mxu0 0.0
    %326 = vmatprep.subr.mxu0 0.0
    %327 = vmatpush2.xpose.msra.mxu0 0.0
    %328 = vmatprep.subr.mxu0 0.0
    %329 = vmatpush2.xpose.msra.mxu0 0.0
    %330 = vmatprep.subr.mxu0 0.0
    %331 = vmatpush2.xpose.msra.mxu0 0.0
    %332 = vmatprep.mubr.f32.mxu0 0.0
    %333 = vmatmul.mubr.f32.gmra.mxu0 %v264
    %v334 = vpop.f32.mrf.mxu0
    %v335 = vadd.f32 %v258, %v334
    %v336 = vpop.f32.mrf.mxu0
    %337 = vdwg.mxu0
    %vm338 = vcmask 64512
    %v339 = vsel %vm338, %v335, -inf
    %340 = vmax.xlane.f32.xlu0 %v339
    %v341 = vpop.xlane.xlu0 %340
    %v342 = vsub.f32 %v335, %v341
    %v343 = vmul.f32 %v342, 1.442695
    %v344 = vpow.pop %v343
    %v345 = vsel %vm338, %v344, 0.0
    %346 = vadd.xlane.f32.xlu0 %v345
    %v347 = vpop.xlane.xlu0 %346
    %v349 = vsel %vm338, %v344, 0
    %351 = vmatprep.subr.mxu0 0.0
    %352 = vmatpush1.msra.mxu0 0.0
    %353 = vmatprep.subr.mxu0 0.0
    %354 = vmatpush1.msra.mxu0 0.0
    %355 = vmatprep.subr.mxu0 0.0
    %356 = vmatpush1.msra.mxu0 0.0
    %357 = vmatprep.subr.mxu0 0.0
    %358 = vmatpush1.msra.mxu0 0.0
    %359 = vmatprep.subr.mxu0 0.0
    %360 = vmatpush1.msra.mxu0 0.0
    %361 = vmatprep.subr.mxu0 0.0
    %362 = vmatpush1.msra.mxu0 0.0
    %363 = vmatprep.subr.mxu0 0.0
    %364 = vmatpush1.msra.mxu0 0.0
    %365 = vmatprep.subr.mxu0 0.0
    %366 = vmatpush1.msra.mxu0 0.0
    %367 = vmatprep.subr.mxu0 0.0
    %368 = vmatpush1.msra.mxu0 0.0
    %369 = vmatprep.subr.mxu0 0.0
    %370 = vmatpush1.msra.mxu0 0.0
    %371 = vmatprep.subr.mxu0 0.0
    %372 = vmatpush1.msra.mxu0 0.0
    %373 = vmatprep.subr.mxu0 0.0
    %374 = vmatpush1.msra.mxu0 0.0
    %375 = vmatprep.subr.mxu0 0.0
    %376 = vmatpush1.msra.mxu0 0.0
    %377 = vmatprep.subr.mxu0 0.0
    %378 = vmatpush1.msra.mxu0 0.0
    %379 = vmatprep.subr.mxu0 0.0
    %380 = vmatpush1.msra.mxu0 0.0
    %381 = vmatprep.subr.mxu0 0.0
    %382 = vmatpush1.msra.mxu0 %v192
    %383 = vmatprep.subr.mxu0 0.0
    %384 = vmatpush2.msra.mxu0 0.0
    %385 = vmatprep.subr.mxu0 0.0
    %386 = vmatpush2.msra.mxu0 0.0
    %387 = vmatprep.subr.mxu0 0.0
    %388 = vmatpush2.msra.mxu0 0.0
    %389 = vmatprep.subr.mxu0 0.0
    %390 = vmatpush2.msra.mxu0 0.0
    %391 = vmatprep.subr.mxu0 0.0
    %392 = vmatpush2.msra.mxu0 0.0
    %393 = vmatprep.subr.mxu0 0.0
    %394 = vmatpush2.msra.mxu0 0.0
    %395 = vmatprep.subr.mxu0 0.0
    %396 = vmatpush2.msra.mxu0 0.0
    %397 = vmatprep.subr.mxu0 0.0
    %398 = vmatpush2.msra.mxu0 0.0
    %399 = vmatprep.subr.mxu0 0.0
    %400 = vmatpush2.msra.mxu0 0.0
    %401 = vmatprep.subr.mxu0 0.0
    %402 = vmatpush2.msra.mxu0 0.0
    %403 = vmatprep.subr.mxu0 0.0
    %404 = vmatpush2.msra.mxu0 0.0
    %405 = vmatprep.subr.mxu0 0.0
    %406 = vmatpush2.msra.mxu0 0.0
    %407 = vmatprep.subr.mxu0 0.0
    %408 = vmatpush2.msra.mxu0 0.0
    %409 = vmatprep.subr.mxu0 0.0
    %410 = vmatpush2.msra.mxu0 0.0
    %411 = vmatprep.subr.mxu0 0.0
    %412 = vmatpush2.msra.mxu0 0.0
    %413 = vmatprep.subr.mxu0 0.0
    %414 = vmatpush2.msra.mxu0 0.0
    %415 = vmatprep.mubr.f32.mxu0 0.0
    %416 = vmatmul.mubr.f32.gmra.mxu0 %v349
    %v417 = vpop.f32.mrf.mxu0
    %v418 = vadd.f32 0.0, %v417
    %v419 = vpop.f32.mrf.mxu0
    %420 = vdwg.mxu0
    %v421 = vrcp.pop %v347
    %v422 = vmul.f32 1.0, %v421
    %v423 = vmul.f32 %v418, %v422
    %424 = vrot.lane.b32.xlu0 %v224, 112
    %v425 = vpop.permute.xlu0 %424
    %426 = vrot.lane.b32.xlu0 %v252, 48
    %v427 = vpop.permute.xlu0 %426
    %v428 = vsel %vm262, %v425, 0
    %v430 = vsel %vm262, %v427, 0
    %432 = vmatprep.subr.mxu0 0.0
    %433 = vmatpush1.xpose.msra.mxu0 0.0
    %434 = vmatprep.subr.mxu0 0.0
    %435 = vmatpush1.xpose.msra.mxu0 0.0
    %436 = vmatprep.subr.mxu0 0.0
    %437 = vmatpush1.xpose.msra.mxu0 0.0
    %438 = vmatprep.subr.mxu0 0.0
    %439 = vmatpush1.xpose.msra.mxu0 0.0
    %440 = vmatprep.subr.mxu0 0.0
    %441 = vmatpush1.xpose.msra.mxu0 0.0
    %442 = vmatprep.subr.mxu0 0.0
    %443 = vmatpush1.xpose.msra.mxu0 0.0
    %444 = vmatprep.subr.mxu0 0.0
    %445 = vmatpush1.xpose.msra.mxu0 0.0
    %446 = vmatprep.subr.mxu0 0.0
    %447 = vmatpush1.xpose.msra.mxu0 0.0
    %448 = vmatprep.subr.mxu0 0.0
    %449 = vmatpush1.xpose.msra.mxu0 0.0
    %450 = vmatprep.subr.mxu0 0.0
    %451 = vmatpush1.xpose.msra.mxu0 0.0
    %452 = vmatprep.subr.mxu0 0.0
    %453 = vmatpush1.xpose.msra.mxu0 0.0
    %454 = vmatprep.subr.mxu0 0.0
    %455 = vmatpush1.xpose.msra.mxu0 0.0
    %456 = vmatprep.subr.mxu0 0.0
    %457 = vmatpush1.xpose.msra.mxu0 0.0
    %458 = vmatprep.subr.mxu0 0.0
    %459 = vmatpush1.xpose.msra.mxu0 0.0
    %460 = vmatprep.subr.mxu0 0.0
    %461 = vmatpush1.xpose.msra.mxu0 0.0
    %462 = vmatprep.subr.mxu0 0.0
    %463 = vmatpush1.xpose.msra.mxu0 %v430
    %464 = vmatprep.subr.mxu0 0.0
    %465 = vmatpush2.xpose.msra.mxu0 0.0
    %466 = vmatprep.subr.mxu0 0.0
    %467 = vmatpush2.xpose.msra.mxu0 0.0
    %468 = vmatprep.subr.mxu0 0.0
    %469 = vmatpush2.xpose.msra.mxu0 0.0
    %470 = vmatprep.subr.mxu0 0.0
    %471 = vmatpush2.xpose.msra.mxu0 0.0
    %472 = vmatprep.subr.mxu0 0.0
    %473 = vmatpush2.xpose.msra.mxu0 0.0
    %474 = vmatprep.subr.mxu0 0.0
    %475 = vmatpush2.xpose.msra.mxu0 0.0
    %476 = vmatprep.subr.mxu0 0.0
    %477 = vmatpush2.xpose.msra.mxu0 0.0
    %478 = vmatprep.subr.mxu0 0.0
    %479 = vmatpush2.xpose.msra.mxu0 0.0
    %480 = vmatprep.subr.mxu0 0.0
    %481 = vmatpush2.xpose.msra.mxu0 0.0
    %482 = vmatprep.subr.mxu0 0.0
    %483 = vmatpush2.xpose.msra.mxu0 0.0
    %484 = vmatprep.subr.mxu0 0.0
    %485 = vmatpush2.xpose.msra.mxu0 0.0
    %486 = vmatprep.subr.mxu0 0.0
    %487 = vmatpush2.xpose.msra.mxu0 0.0
    %488 = vmatprep.subr.mxu0 0.0
    %489 = vmatpush2.xpose.msra.mxu0 0.0
    %490 = vmatprep.subr.mxu0 0.0
    %491 = vmatpush2.xpose.msra.mxu0 0.0
    %492 = vmatprep.subr.mxu0 0.0
    %493 = vmatpush2.xpose.msra.mxu0 0.0
    %494 = vmatprep.subr.mxu0 0.0
    %495 = vmatpush2.xpose.msra.mxu0 0.0
    %496 = vmatprep.mubr.f32.mxu0 0.0
    %497 = vmatmul.mubr.f32.gmra.mxu0 %v428
    %v498 = vpop.f32.mrf.mxu0
    %v499 = vadd.f32 %v258, %v498
    %v500 = vpop.f32.mrf.mxu0
    %501 = vdwg.mxu0
    %v502 = vsel %vm338, %v499, -inf
    %503 = vmax.xlane.f32.xlu0 %v502
    %v504 = vpop.xlane.xlu0 %503
    %v505 = vsub.f32 %v499, %v504
    %v506 = vmul.f32 %v505, 1.442695
    %v507 = vpow.pop %v506
    %v508 = vsel %vm338, %v507, 0.0
    %509 = vadd.xlane.f32.xlu0 %v508
    %v510 = vpop.xlane.xlu0 %509
    %512 = vrot.lane.b32.xlu0 %v192, 112
    %v513 = vpop.permute.xlu0 %512
    %v516 = vsel %vm338, %v507, 0
    %518 = vmatprep.subr.mxu0 0.0
    %519 = vmatpush1.msra.mxu0 0.0
    %520 = vmatprep.subr.mxu0 0.0
    %521 = vmatpush1.msra.mxu0 0.0
    %522 = vmatprep.subr.mxu0 0.0
    %523 = vmatpush1.msra.mxu0 0.0
    %524 = vmatprep.subr.mxu0 0.0
    %525 = vmatpush1.msra.mxu0 0.0
    %526 = vmatprep.subr.mxu0 0.0
    %527 = vmatpush1.msra.mxu0 0.0
    %528 = vmatprep.subr.mxu0 0.0
    %529 = vmatpush1.msra.mxu0 0.0
    %530 = vmatprep.subr.mxu0 0.0
    %531 = vmatpush1.msra.mxu0 0.0
    %532 = vmatprep.subr.mxu0 0.0
    %533 = vmatpush1.msra.mxu0 0.0
    %534 = vmatprep.subr.mxu0 0.0
    %535 = vmatpush1.msra.mxu0 0.0
    %536 = vmatprep.subr.mxu0 0.0
    %537 = vmatpush1.msra.mxu0 0.0
    %538 = vmatprep.subr.mxu0 0.0
    %539 = vmatpush1.msra.mxu0 0.0
    %540 = vmatprep.subr.mxu0 0.0
    %541 = vmatpush1.msra.mxu0 0.0
    %542 = vmatprep.subr.mxu0 0.0
    %543 = vmatpush1.msra.mxu0 0.0
    %544 = vmatprep.subr.mxu0 0.0
    %545 = vmatpush1.msra.mxu0 0.0
    %546 = vmatprep.subr.mxu0 0.0
    %547 = vmatpush1.msra.mxu0 0.0
    %548 = vmatprep.subr.mxu0 0.0
    %549 = vmatpush1.msra.mxu0 %v513
    %550 = vmatprep.subr.mxu0 0.0
    %551 = vmatpush2.msra.mxu0 0.0
    %552 = vmatprep.subr.mxu0 0.0
    %553 = vmatpush2.msra.mxu0 0.0
    %554 = vmatprep.subr.mxu0 0.0
    %555 = vmatpush2.msra.mxu0 0.0
    %556 = vmatprep.subr.mxu0 0.0
    %557 = vmatpush2.msra.mxu0 0.0
    %558 = vmatprep.subr.mxu0 0.0
    %559 = vmatpush2.msra.mxu0 0.0
    %560 = vmatprep.subr.mxu0 0.0
    %561 = vmatpush2.msra.mxu0 0.0
    %562 = vmatprep.subr.mxu0 0.0
    %563 = vmatpush2.msra.mxu0 0.0
    %564 = vmatprep.subr.mxu0 0.0
    %565 = vmatpush2.msra.mxu0 0.0
    %566 = vmatprep.subr.mxu0 0.0
    %567 = vmatpush2.msra.mxu0 0.0
    %568 = vmatprep.subr.mxu0 0.0
    %569 = vmatpush2.msra.mxu0 0.0
    %570 = vmatprep.subr.mxu0 0.0
    %571 = vmatpush2.msra.mxu0 0.0
    %572 = vmatprep.subr.mxu0 0.0
    %573 = vmatpush2.msra.mxu0 0.0
    %574 = vmatprep.subr.mxu0 0.0
    %575 = vmatpush2.msra.mxu0 0.0
    %576 = vmatprep.subr.mxu0 0.0
    %577 = vmatpush2.msra.mxu0 0.0
    %578 = vmatprep.subr.mxu0 0.0
    %579 = vmatpush2.msra.mxu0 0.0
    %580 = vmatprep.subr.mxu0 0.0
    %581 = vmatpush2.msra.mxu0 0.0
    %582 = vmatprep.mubr.f32.mxu0 0.0
    %583 = vmatmul.mubr.f32.gmra.mxu0 %v516
    %v584 = vpop.f32.mrf.mxu0
    %v585 = vadd.f32 0.0, %v584
    %v586 = vpop.f32.mrf.mxu0
    %587 = vdwg.mxu0
    %v588 = vrcp.pop %v510
    %v589 = vmul.f32 1.0, %v588
    %v590 = vmul.f32 %v585, %v589
    %v592 = vsel %vm262, %v590, 0
    %594 = vmatprep.subr.mxu0 0.0
    %595 = vmatpush1.msra.mxu0 0.0
    %596 = vmatprep.subr.mxu0 0.0
    %597 = vmatpush1.msra.mxu0 0.0
    %598 = vmatprep.subr.mxu0 0.0
    %599 = vmatpush1.msra.mxu0 0.0
    %600 = vmatprep.subr.mxu0 0.0
    %601 = vmatpush1.msra.mxu0 0.0
    %602 = vmatprep.subr.mxu0 0.0
    %603 = vmatpush1.msra.mxu0 0.0
    %604 = vmatprep.subr.mxu0 0.0
    %605 = vmatpush1.msra.mxu0 0.0
    %606 = vmatprep.subr.mxu0 0.0
    %607 = vmatpush1.msra.mxu0 0.0
    %608 = vmatprep.subr.mxu0 0.0
    %609 = vmatpush1.msra.mxu0 0.0
    %610 = vmatprep.subr.mxu0 0.0
    %611 = vmatpush1.msra.mxu0 0.0
    %612 = vmatprep.subr.mxu0 0.0
    %613 = vmatpush1.msra.mxu0 0.0
    %614 = vmatprep.subr.mxu0 0.0
    %615 = vmatpush1.msra.mxu0 0.0
    %616 = vmatprep.subr.mxu0 0.0
    %617 = vmatpush1.msra.mxu0 0.0
    %618 = vmatprep.subr.mxu0 0.0
    %619 = vmatpush1.msra.mxu0 0.0
    %620 = vmatprep.subr.mxu0 0.0
    %621 = vmatpush1.msra.mxu0 0.0
    %622 = vmatprep.subr.mxu0 0.0
    %623 = vmatpush1.msra.mxu0 %v257
    %624 = vmatprep.subr.mxu0 0.0
    %625 = vmatpush1.msra.mxu0 %v256
    %626 = vmatprep.subr.mxu0 0.0
    %627 = vmatpush2.msra.mxu0 0.0
    %628 = vmatprep.subr.mxu0 0.0
    %629 = vmatpush2.msra.mxu0 0.0
    %630 = vmatprep.subr.mxu0 0.0
    %631 = vmatpush2.msra.mxu0 0.0
    %632 = vmatprep.subr.mxu0 0.0
    %633 = vmatpush2.msra.mxu0 0.0
    %634 = vmatprep.subr.mxu0 0.0
    %635 = vmatpush2.msra.mxu0 0.0
    %636 = vmatprep.subr.mxu0 0.0
    %637 = vmatpush2.msra.mxu0 0.0
    %638 = vmatprep.subr.mxu0 0.0
    %639 = vmatpush2.msra.mxu0 0.0
    %640 = vmatprep.subr.mxu0 0.0
    %641 = vmatpush2.msra.mxu0 0.0
    %642 = vmatprep.subr.mxu0 0.0
    %643 = vmatpush2.msra.mxu0 0.0
    %644 = vmatprep.subr.mxu0 0.0
    %645 = vmatpush2.msra.mxu0 0.0
    %646 = vmatprep.subr.mxu0 0.0
    %647 = vmatpush2.msra.mxu0 0.0
    %648 = vmatprep.subr.mxu0 0.0
    %649 = vmatpush2.msra.mxu0 0.0
    %650 = vmatprep.subr.mxu0 0.0
    %651 = vmatpush2.msra.mxu0 0.0
    %652 = vmatprep.subr.mxu0 0.0
    %653 = vmatpush2.msra.mxu0 0.0
    %654 = vmatprep.subr.mxu0 0.0
    %655 = vmatpush2.msra.mxu0 0.0
    %656 = vmatprep.subr.mxu0 0.0
    %657 = vmatpush2.msra.mxu0 0.0
    %658 = vmatprep.mubr.f32.mxu0 0.0
    %659 = vmatmul.mubr.f32.gmra.mxu0 %v592
    %v660 = vpop.f32.mrf.mxu0
    %v661 = vadd.f32 0.0, %v660
    %v662 = vpop.f32.mrf.mxu0
    %663 = vdwg.mxu0
    %v665 = vsel %vm262, %v423, 0
    %667 = vmatprep.subr.mxu0 0.0
    %668 = vmatpush1.msra.mxu0 0.0
    %669 = vmatprep.subr.mxu0 0.0
    %670 = vmatpush1.msra.mxu0 0.0
    %671 = vmatprep.subr.mxu0 0.0
    %672 = vmatpush1.msra.mxu0 0.0
    %673 = vmatprep.subr.mxu0 0.0
    %674 = vmatpush1.msra.mxu0 0.0
    %675 = vmatprep.subr.mxu0 0.0
    %676 = vmatpush1.msra.mxu0 0.0
    %677 = vmatprep.subr.mxu0 0.0
    %678 = vmatpush1.msra.mxu0 0.0
    %679 = vmatprep.subr.mxu0 0.0
    %680 = vmatpush1.msra.mxu0 0.0
    %681 = vmatprep.subr.mxu0 0.0
    %682 = vmatpush1.msra.mxu0 0.0
    %683 = vmatprep.subr.mxu0 0.0
    %684 = vmatpush1.msra.mxu0 0.0
    %685 = vmatprep.subr.mxu0 0.0
    %686 = vmatpush1.msra.mxu0 0.0
    %687 = vmatprep.subr.mxu0 0.0
    %688 = vmatpush1.msra.mxu0 0.0
    %689 = vmatprep.subr.mxu0 0.0
    %690 = vmatpush1.msra.mxu0 0.0
    %691 = vmatprep.subr.mxu0 0.0
    %692 = vmatpush1.msra.mxu0 0.0
    %693 = vmatprep.subr.mxu0 0.0
    %694 = vmatpush1.msra.mxu0 0.0
    %695 = vmatprep.subr.mxu0 0.0
    %696 = vmatpush1.msra.mxu0 %v255
    %697 = vmatprep.subr.mxu0 0.0
    %698 = vmatpush1.msra.mxu0 %v254
    %699 = vmatprep.subr.mxu0 0.0
    %700 = vmatpush2.msra.mxu0 0.0
    %701 = vmatprep.subr.mxu0 0.0
    %702 = vmatpush2.msra.mxu0 0.0
    %703 = vmatprep.subr.mxu0 0.0
    %704 = vmatpush2.msra.mxu0 0.0
    %705 = vmatprep.subr.mxu0 0.0
    %706 = vmatpush2.msra.mxu0 0.0
    %707 = vmatprep.subr.mxu0 0.0
    %708 = vmatpush2.msra.mxu0 0.0
    %709 = vmatprep.subr.mxu0 0.0
    %710 = vmatpush2.msra.mxu0 0.0
    %711 = vmatprep.subr.mxu0 0.0
    %712 = vmatpush2.msra.mxu0 0.0
    %713 = vmatprep.subr.mxu0 0.0
    %714 = vmatpush2.msra.mxu0 0.0
    %715 = vmatprep.subr.mxu0 0.0
    %716 = vmatpush2.msra.mxu0 0.0
    %717 = vmatprep.subr.mxu0 0.0
    %718 = vmatpush2.msra.mxu0 0.0
    %719 = vmatprep.subr.mxu0 0.0
    %720 = vmatpush2.msra.mxu0 0.0
    %721 = vmatprep.subr.mxu0 0.0
    %722 = vmatpush2.msra.mxu0 0.0
    %723 = vmatprep.subr.mxu0 0.0
    %724 = vmatpush2.msra.mxu0 0.0
    %725 = vmatprep.subr.mxu0 0.0
    %726 = vmatpush2.msra.mxu0 0.0
    %727 = vmatprep.subr.mxu0 0.0
    %728 = vmatpush2.msra.mxu0 0.0
    %729 = vmatprep.subr.mxu0 0.0
    %730 = vmatpush2.msra.mxu0 0.0
    %731 = vmatprep.mubr.f32.mxu0 0.0
    %732 = vmatmul.mubr.f32.gmra.mxu0 %v665
    %v733 = vpop.f32.mrf.mxu0
    %v734 = vadd.f32 %v661, %v733
    %v735 = vpop.f32.mrf.mxu0
    %736 = vdwg.mxu0
    %737 = vst [vmem:[#allocation13] sm:$0xff] %v734
    %s738 = scalar_lea.vmem [#allocation5], 8
    %v739 = vld [vmem:[%s738] sm:$0xff]
    %741 = vrot.lane.b32.xlu0 %v253, 64
    %v742 = vpop.permute.xlu0 %741
    %v744 = vsel %vm262, %v225, 0
    %v746 = vsel %vm262, %v742, 0
    %748 = vmatprep.subr.mxu0 0.0
    %749 = vmatpush1.xpose.msra.mxu0 0.0
    %750 = vmatprep.subr.mxu0 0.0
    %751 = vmatpush1.xpose.msra.mxu0 0.0
    %752 = vmatprep.subr.mxu0 0.0
    %753 = vmatpush1.xpose.msra.mxu0 0.0
    %754 = vmatprep.subr.mxu0 0.0
    %755 = vmatpush1.xpose.msra.mxu0 0.0
    %756 = vmatprep.subr.mxu0 0.0
    %757 = vmatpush1.xpose.msra.mxu0 0.0
    %758 = vmatprep.subr.mxu0 0.0
    %759 = vmatpush1.xpose.msra.mxu0 0.0
    %760 = vmatprep.subr.mxu0 0.0
    %761 = vmatpush1.xpose.msra.mxu0 0.0
    %762 = vmatprep.subr.mxu0 0.0
    %763 = vmatpush1.xpose.msra.mxu0 0.0
    %764 = vmatprep.subr.mxu0 0.0
    %765 = vmatpush1.xpose.msra.mxu0 0.0
    %766 = vmatprep.subr.mxu0 0.0
    %767 = vmatpush1.xpose.msra.mxu0 0.0
    %768 = vmatprep.subr.mxu0 0.0
    %769 = vmatpush1.xpose.msra.mxu0 0.0
    %770 = vmatprep.subr.mxu0 0.0
    %771 = vmatpush1.xpose.msra.mxu0 0.0
    %772 = vmatprep.subr.mxu0 0.0
    %773 = vmatpush1.xpose.msra.mxu0 0.0
    %774 = vmatprep.subr.mxu0 0.0
    %775 = vmatpush1.xpose.msra.mxu0 0.0
    %776 = vmatprep.subr.mxu0 0.0
    %777 = vmatpush1.xpose.msra.mxu0 0.0
    %778 = vmatprep.subr.mxu0 0.0
    %779 = vmatpush1.xpose.msra.mxu0 %v746
    %780 = vmatprep.subr.mxu0 0.0
    %781 = vmatpush2.xpose.msra.mxu0 0.0
    %782 = vmatprep.subr.mxu0 0.0
    %783 = vmatpush2.xpose.msra.mxu0 0.0
    %784 = vmatprep.subr.mxu0 0.0
    %785 = vmatpush2.xpose.msra.mxu0 0.0
    %786 = vmatprep.subr.mxu0 0.0
    %787 = vmatpush2.xpose.msra.mxu0 0.0
    %788 = vmatprep.subr.mxu0 0.0
    %789 = vmatpush2.xpose.msra.mxu0 0.0
    %790 = vmatprep.subr.mxu0 0.0
    %791 = vmatpush2.xpose.msra.mxu0 0.0
    %792 = vmatprep.subr.mxu0 0.0
    %793 = vmatpush2.xpose.msra.mxu0 0.0
    %794 = vmatprep.subr.mxu0 0.0
    %795 = vmatpush2.xpose.msra.mxu0 0.0
    %796 = vmatprep.subr.mxu0 0.0
    %797 = vmatpush2.xpose.msra.mxu0 0.0
    %798 = vmatprep.subr.mxu0 0.0
    %799 = vmatpush2.xpose.msra.mxu0 0.0
    %800 = vmatprep.subr.mxu0 0.0
    %801 = vmatpush2.xpose.msra.mxu0 0.0
    %802 = vmatprep.subr.mxu0 0.0
    %803 = vmatpush2.xpose.msra.mxu0 0.0
    %804 = vmatprep.subr.mxu0 0.0
    %805 = vmatpush2.xpose.msra.mxu0 0.0
    %806 = vmatprep.subr.mxu0 0.0
    %807 = vmatpush2.xpose.msra.mxu0 0.0
    %808 = vmatprep.subr.mxu0 0.0
    %809 = vmatpush2.xpose.msra.mxu0 0.0
    %810 = vmatprep.subr.mxu0 0.0
    %811 = vmatpush2.xpose.msra.mxu0 0.0
    %812 = vmatprep.mubr.f32.mxu0 0.0
    %813 = vmatmul.mubr.f32.gmra.mxu0 %v744
    %v814 = vpop.f32.mrf.mxu0
    %v815 = vadd.f32 %v739, %v814
    %v816 = vpop.f32.mrf.mxu0
    %817 = vdwg.mxu0
    %v818 = vsel %vm338, %v815, -inf
    %819 = vmax.xlane.f32.xlu0 %v818
    %v820 = vpop.xlane.xlu0 %819
    %v821 = vsub.f32 %v815, %v820
    %v822 = vmul.f32 %v821, 1.442695
    %v823 = vpow.pop %v822
    %v824 = vsel %vm338, %v823, 0.0
    %825 = vadd.xlane.f32.xlu0 %v824
    %v826 = vpop.xlane.xlu0 %825
    %v828 = vsel %vm338, %v823, 0
    %830 = vmatprep.subr.mxu0 0.0
    %831 = vmatpush1.msra.mxu0 0.0
    %832 = vmatprep.subr.mxu0 0.0
    %833 = vmatpush1.msra.mxu0 0.0
    %834 = vmatprep.subr.mxu0 0.0
    %835 = vmatpush1.msra.mxu0 0.0
    %836 = vmatprep.subr.mxu0 0.0
    %837 = vmatpush1.msra.mxu0 0.0
    %838 = vmatprep.subr.mxu0 0.0
    %839 = vmatpush1.msra.mxu0 0.0
    %840 = vmatprep.subr.mxu0 0.0
    %841 = vmatpush1.msra.mxu0 0.0
    %842 = vmatprep.subr.mxu0 0.0
    %843 = vmatpush1.msra.mxu0 0.0
    %844 = vmatprep.subr.mxu0 0.0
    %845 = vmatpush1.msra.mxu0 0.0
    %846 = vmatprep.subr.mxu0 0.0
    %847 = vmatpush1.msra.mxu0 0.0
    %848 = vmatprep.subr.mxu0 0.0
    %849 = vmatpush1.msra.mxu0 0.0
    %850 = vmatprep.subr.mxu0 0.0
    %851 = vmatpush1.msra.mxu0 0.0
    %852 = vmatprep.subr.mxu0 0.0
    %853 = vmatpush1.msra.mxu0 0.0
    %854 = vmatprep.subr.mxu0 0.0
    %855 = vmatpush1.msra.mxu0 0.0
    %856 = vmatprep.subr.mxu0 0.0
    %857 = vmatpush1.msra.mxu0 0.0
    %858 = vmatprep.subr.mxu0 0.0
    %859 = vmatpush1.msra.mxu0 0.0
    %860 = vmatprep.subr.mxu0 0.0
    %861 = vmatpush1.msra.mxu0 %v198
    %862 = vmatprep.subr.mxu0 0.0
    %863 = vmatpush2.msra.mxu0 0.0
    %864 = vmatprep.subr.mxu0 0.0
    %865 = vmatpush2.msra.mxu0 0.0
    %866 = vmatprep.subr.mxu0 0.0
    %867 = vmatpush2.msra.mxu0 0.0
    %868 = vmatprep.subr.mxu0 0.0
    %869 = vmatpush2.msra.mxu0 0.0
    %870 = vmatprep.subr.mxu0 0.0
    %871 = vmatpush2.msra.mxu0 0.0
    %872 = vmatprep.subr.mxu0 0.0
    %873 = vmatpush2.msra.mxu0 0.0
    %874 = vmatprep.subr.mxu0 0.0
    %875 = vmatpush2.msra.mxu0 0.0
    %876 = vmatprep.subr.mxu0 0.0
    %877 = vmatpush2.msra.mxu0 0.0
    %878 = vmatprep.subr.mxu0 0.0
    %879 = vmatpush2.msra.mxu0 0.0
    %880 = vmatprep.subr.mxu0 0.0
    %881 = vmatpush2.msra.mxu0 0.0
    %882 = vmatprep.subr.mxu0 0.0
    %883 = vmatpush2.msra.mxu0 0.0
    %884 = vmatprep.subr.mxu0 0.0
    %885 = vmatpush2.msra.mxu0 0.0
    %886 = vmatprep.subr.mxu0 0.0
    %887 = vmatpush2.msra.mxu0 0.0
    %888 = vmatprep.subr.mxu0 0.0
    %889 = vmatpush2.msra.mxu0 0.0
    %890 = vmatprep.subr.mxu0 0.0
    %891 = vmatpush2.msra.mxu0 0.0
    %892 = vmatprep.subr.mxu0 0.0
    %893 = vmatpush2.msra.mxu0 0.0
    %894 = vmatprep.mubr.f32.mxu0 0.0
    %895 = vmatmul.mubr.f32.gmra.mxu0 %v828
    %v896 = vpop.f32.mrf.mxu0
    %v897 = vadd.f32 0.0, %v896
    %v898 = vpop.f32.mrf.mxu0
    %899 = vdwg.mxu0
    %v900 = vrcp.pop %v826
    %v901 = vmul.f32 1.0, %v900
    %v902 = vmul.f32 %v897, %v901
    %903 = vrot.lane.b32.xlu0 %v225, 112
    %v904 = vpop.permute.xlu0 %903
    %905 = vrot.lane.b32.xlu0 %v253, 48
    %v906 = vpop.permute.xlu0 %905
    %v907 = vsel %vm262, %v904, 0
    %v909 = vsel %vm262, %v906, 0
    %911 = vmatprep.subr.mxu0 0.0
    %912 = vmatpush1.xpose.msra.mxu0 0.0
    %913 = vmatprep.subr.mxu0 0.0
    %914 = vmatpush1.xpose.msra.mxu0 0.0
    %915 = vmatprep.subr.mxu0 0.0
    %916 = vmatpush1.xpose.msra.mxu0 0.0
    %917 = vmatprep.subr.mxu0 0.0
    %918 = vmatpush1.xpose.msra.mxu0 0.0
    %919 = vmatprep.subr.mxu0 0.0
    %920 = vmatpush1.xpose.msra.mxu0 0.0
    %921 = vmatprep.subr.mxu0 0.0
    %922 = vmatpush1.xpose.msra.mxu0 0.0
    %923 = vmatprep.subr.mxu0 0.0
    %924 = vmatpush1.xpose.msra.mxu0 0.0
    %925 = vmatprep.subr.mxu0 0.0
    %926 = vmatpush1.xpose.msra.mxu0 0.0
    %927 = vmatprep.subr.mxu0 0.0
    %928 = vmatpush1.xpose.msra.mxu0 0.0
    %929 = vmatprep.subr.mxu0 0.0
    %930 = vmatpush1.xpose.msra.mxu0 0.0
    %931 = vmatprep.subr.mxu0 0.0
    %932 = vmatpush1.xpose.msra.mxu0 0.0
    %933 = vmatprep.subr.mxu0 0.0
    %934 = vmatpush1.xpose.msra.mxu0 0.0
    %935 = vmatprep.subr.mxu0 0.0
    %936 = vmatpush1.xpose.msra.mxu0 0.0
    %937 = vmatprep.subr.mxu0 0.0
    %938 = vmatpush1.xpose.msra.mxu0 0.0
    %939 = vmatprep.subr.mxu0 0.0
    %940 = vmatpush1.xpose.msra.mxu0 0.0
    %941 = vmatprep.subr.mxu0 0.0
    %942 = vmatpush1.xpose.msra.mxu0 %v909
    %943 = vmatprep.subr.mxu0 0.0
    %944 = vmatpush2.xpose.msra.mxu0 0.0
    %945 = vmatprep.subr.mxu0 0.0
    %946 = vmatpush2.xpose.msra.mxu0 0.0
    %947 = vmatprep.subr.mxu0 0.0
    %948 = vmatpush2.xpose.msra.mxu0 0.0
    %949 = vmatprep.subr.mxu0 0.0
    %950 = vmatpush2.xpose.msra.mxu0 0.0
    %951 = vmatprep.subr.mxu0 0.0
    %952 = vmatpush2.xpose.msra.mxu0 0.0
    %953 = vmatprep.subr.mxu0 0.0
    %954 = vmatpush2.xpose.msra.mxu0 0.0
    %955 = vmatprep.subr.mxu0 0.0
    %956 = vmatpush2.xpose.msra.mxu0 0.0
    %957 = vmatprep.subr.mxu0 0.0
    %958 = vmatpush2.xpose.msra.mxu0 0.0
    %959 = vmatprep.subr.mxu0 0.0
    %960 = vmatpush2.xpose.msra.mxu0 0.0
    %961 = vmatprep.subr.mxu0 0.0
    %962 = vmatpush2.xpose.msra.mxu0 0.0
    %963 = vmatprep.subr.mxu0 0.0
    %964 = vmatpush2.xpose.msra.mxu0 0.0
    %965 = vmatprep.subr.mxu0 0.0
    %966 = vmatpush2.xpose.msra.mxu0 0.0
    %967 = vmatprep.subr.mxu0 0.0
    %968 = vmatpush2.xpose.msra.mxu0 0.0
    %969 = vmatprep.subr.mxu0 0.0
    %970 = vmatpush2.xpose.msra.mxu0 0.0
    %971 = vmatprep.subr.mxu0 0.0
    %972 = vmatpush2.xpose.msra.mxu0 0.0
    %973 = vmatprep.subr.mxu0 0.0
    %974 = vmatpush2.xpose.msra.mxu0 0.0
    %975 = vmatprep.mubr.f32.mxu0 0.0
    %976 = vmatmul.mubr.f32.gmra.mxu0 %v907
    %v977 = vpop.f32.mrf.mxu0
    %v978 = vadd.f32 %v739, %v977
    %v979 = vpop.f32.mrf.mxu0
    %980 = vdwg.mxu0
    %v981 = vsel %vm338, %v978, -inf
    %982 = vmax.xlane.f32.xlu0 %v981
    %v983 = vpop.xlane.xlu0 %982
    %v984 = vsub.f32 %v978, %v983
    %v985 = vmul.f32 %v984, 1.442695
    %v986 = vpow.pop %v985
    %v987 = vsel %vm338, %v986, 0.0
    %988 = vadd.xlane.f32.xlu0 %v987
    %v989 = vpop.xlane.xlu0 %988
    %991 = vrot.lane.b32.xlu0 %v198, 112
    %v992 = vpop.permute.xlu0 %991
    %v995 = vsel %vm338, %v986, 0
    %997 = vmatprep.subr.mxu0 0.0
    %998 = vmatpush1.msra.mxu0 0.0
    %999 = vmatprep.subr.mxu0 0.0
    %1000 = vmatpush1.msra.mxu0 0.0
    %1001 = vmatprep.subr.mxu0 0.0
    %1002 = vmatpush1.msra.mxu0 0.0
    %1003 = vmatprep.subr.mxu0 0.0
    %1004 = vmatpush1.msra.mxu0 0.0
    %1005 = vmatprep.subr.mxu0 0.0
    %1006 = vmatpush1.msra.mxu0 0.0
    %1007 = vmatprep.subr.mxu0 0.0
    %1008 = vmatpush1.msra.mxu0 0.0
    %1009 = vmatprep.subr.mxu0 0.0
    %1010 = vmatpush1.msra.mxu0 0.0
    %1011 = vmatprep.subr.mxu0 0.0
    %1012 = vmatpush1.msra.mxu0 0.0
    %1013 = vmatprep.subr.mxu0 0.0
    %1014 = vmatpush1.msra.mxu0 0.0
    %1015 = vmatprep.subr.mxu0 0.0
    %1016 = vmatpush1.msra.mxu0 0.0
    %1017 = vmatprep.subr.mxu0 0.0
    %1018 = vmatpush1.msra.mxu0 0.0
    %1019 = vmatprep.subr.mxu0 0.0
    %1020 = vmatpush1.msra.mxu0 0.0
    %1021 = vmatprep.subr.mxu0 0.0
    %1022 = vmatpush1.msra.mxu0 0.0
    %1023 = vmatprep.subr.mxu0 0.0
    %1024 = vmatpush1.msra.mxu0 0.0
    %1025 = vmatprep.subr.mxu0 0.0
    %1026 = vmatpush1.msra.mxu0 0.0
    %1027 = vmatprep.subr.mxu0 0.0
    %1028 = vmatpush1.msra.mxu0 %v992
    %1029 = vmatprep.subr.mxu0 0.0
    %1030 = vmatpush2.msra.mxu0 0.0
    %1031 = vmatprep.subr.mxu0 0.0
    %1032 = vmatpush2.msra.mxu0 0.0
    %1033 = vmatprep.subr.mxu0 0.0
    %1034 = vmatpush2.msra.mxu0 0.0
    %1035 = vmatprep.subr.mxu0 0.0
    %1036 = vmatpush2.msra.mxu0 0.0
    %1037 = vmatprep.subr.mxu0 0.0
    %1038 = vmatpush2.msra.mxu0 0.0
    %1039 = vmatprep.subr.mxu0 0.0
    %1040 = vmatpush2.msra.mxu0 0.0
    %1041 = vmatprep.subr.mxu0 0.0
    %1042 = vmatpush2.msra.mxu0 0.0
    %1043 = vmatprep.subr.mxu0 0.0
    %1044 = vmatpush2.msra.mxu0 0.0
    %1045 = vmatprep.subr.mxu0 0.0
    %1046 = vmatpush2.msra.mxu0 0.0
    %1047 = vmatprep.subr.mxu0 0.0
    %1048 = vmatpush2.msra.mxu0 0.0
    %1049 = vmatprep.subr.mxu0 0.0
    %1050 = vmatpush2.msra.mxu0 0.0
    %1051 = vmatprep.subr.mxu0 0.0
    %1052 = vmatpush2.msra.mxu0 0.0
    %1053 = vmatprep.subr.mxu0 0.0
    %1054 = vmatpush2.msra.mxu0 0.0
    %1055 = vmatprep.subr.mxu0 0.0
    %1056 = vmatpush2.msra.mxu0 0.0
    %1057 = vmatprep.subr.mxu0 0.0
    %1058 = vmatpush2.msra.mxu0 0.0
    %1059 = vmatprep.subr.mxu0 0.0
    %1060 = vmatpush2.msra.mxu0 0.0
    %1061 = vmatprep.mubr.f32.mxu0 0.0
    %1062 = vmatmul.mubr.f32.gmra.mxu0 %v995
    %v1063 = vpop.f32.mrf.mxu0
    %v1064 = vadd.f32 0.0, %v1063
    %v1065 = vpop.f32.mrf.mxu0
    %1066 = vdwg.mxu0
    %v1067 = vrcp.pop %v989
    %v1068 = vmul.f32 1.0, %v1067
    %v1069 = vmul.f32 %v1064, %v1068
    %v1071 = vsel %vm262, %v1069, 0
    %1073 = vmatprep.subr.mxu0 0.0
    %1074 = vmatpush1.msra.mxu0 0.0
    %1075 = vmatprep.subr.mxu0 0.0
    %1076 = vmatpush1.msra.mxu0 0.0
    %1077 = vmatprep.subr.mxu0 0.0
    %1078 = vmatpush1.msra.mxu0 0.0
    %1079 = vmatprep.subr.mxu0 0.0
    %1080 = vmatpush1.msra.mxu0 0.0
    %1081 = vmatprep.subr.mxu0 0.0
    %1082 = vmatpush1.msra.mxu0 0.0
    %1083 = vmatprep.subr.mxu0 0.0
    %1084 = vmatpush1.msra.mxu0 0.0
    %1085 = vmatprep.subr.mxu0 0.0
    %1086 = vmatpush1.msra.mxu0 0.0
    %1087 = vmatprep.subr.mxu0 0.0
    %1088 = vmatpush1.msra.mxu0 0.0
    %1089 = vmatprep.subr.mxu0 0.0
    %1090 = vmatpush1.msra.mxu0 0.0
    %1091 = vmatprep.subr.mxu0 0.0
    %1092 = vmatpush1.msra.mxu0 0.0
    %1093 = vmatprep.subr.mxu0 0.0
    %1094 = vmatpush1.msra.mxu0 0.0
    %1095 = vmatprep.subr.mxu0 0.0
    %1096 = vmatpush1.msra.mxu0 0.0
    %1097 = vmatprep.subr.mxu0 0.0
    %1098 = vmatpush1.msra.mxu0 0.0
    %1099 = vmatprep.subr.mxu0 0.0
    %1100 = vmatpush1.msra.mxu0 0.0
    %1101 = vmatprep.subr.mxu0 0.0
    %1102 = vmatpush1.msra.mxu0 %v257
    %1103 = vmatprep.subr.mxu0 0.0
    %1104 = vmatpush1.msra.mxu0 %v256
    %1105 = vmatprep.subr.mxu0 0.0
    %1106 = vmatpush2.msra.mxu0 0.0
    %1107 = vmatprep.subr.mxu0 0.0
    %1108 = vmatpush2.msra.mxu0 0.0
    %1109 = vmatprep.subr.mxu0 0.0
    %1110 = vmatpush2.msra.mxu0 0.0
    %1111 = vmatprep.subr.mxu0 0.0
    %1112 = vmatpush2.msra.mxu0 0.0
    %1113 = vmatprep.subr.mxu0 0.0
    %1114 = vmatpush2.msra.mxu0 0.0
    %1115 = vmatprep.subr.mxu0 0.0
    %1116 = vmatpush2.msra.mxu0 0.0
    %1117 = vmatprep.subr.mxu0 0.0
    %1118 = vmatpush2.msra.mxu0 0.0
    %1119 = vmatprep.subr.mxu0 0.0
    %1120 = vmatpush2.msra.mxu0 0.0
    %1121 = vmatprep.subr.mxu0 0.0
    %1122 = vmatpush2.msra.mxu0 0.0
    %1123 = vmatprep.subr.mxu0 0.0
    %1124 = vmatpush2.msra.mxu0 0.0
    %1125 = vmatprep.subr.mxu0 0.0
    %1126 = vmatpush2.msra.mxu0 0.0
    %1127 = vmatprep.subr.mxu0 0.0
    %1128 = vmatpush2.msra.mxu0 0.0
    %1129 = vmatprep.subr.mxu0 0.0
    %1130 = vmatpush2.msra.mxu0 0.0
    %1131 = vmatprep.subr.mxu0 0.0
    %1132 = vmatpush2.msra.mxu0 0.0
    %1133 = vmatprep.subr.mxu0 0.0
    %1134 = vmatpush2.msra.mxu0 0.0
    %1135 = vmatprep.subr.mxu0 0.0
    %1136 = vmatpush2.msra.mxu0 0.0
    %1137 = vmatprep.mubr.f32.mxu0 0.0
    %1138 = vmatmul.mubr.f32.gmra.mxu0 %v1071
    %v1139 = vpop.f32.mrf.mxu0
    %v1140 = vadd.f32 0.0, %v1139
    %v1141 = vpop.f32.mrf.mxu0
    %1142 = vdwg.mxu0
    %v1144 = vsel %vm262, %v902, 0
    %1146 = vmatprep.subr.mxu0 0.0
    %1147 = vmatpush1.msra.mxu0 0.0
    %1148 = vmatprep.subr.mxu0 0.0
    %1149 = vmatpush1.msra.mxu0 0.0
    %1150 = vmatprep.subr.mxu0 0.0
    %1151 = vmatpush1.msra.mxu0 0.0
    %1152 = vmatprep.subr.mxu0 0.0
    %1153 = vmatpush1.msra.mxu0 0.0
    %1154 = vmatprep.subr.mxu0 0.0
    %1155 = vmatpush1.msra.mxu0 0.0
    %1156 = vmatprep.subr.mxu0 0.0
    %1157 = vmatpush1.msra.mxu0 0.0
    %1158 = vmatprep.subr.mxu0 0.0
    %1159 = vmatpush1.msra.mxu0 0.0
    %1160 = vmatprep.subr.mxu0 0.0
    %1161 = vmatpush1.msra.mxu0 0.0
    %1162 = vmatprep.subr.mxu0 0.0
    %1163 = vmatpush1.msra.mxu0 0.0
    %1164 = vmatprep.subr.mxu0 0.0
    %1165 = vmatpush1.msra.mxu0 0.0
    %1166 = vmatprep.subr.mxu0 0.0
    %1167 = vmatpush1.msra.mxu0 0.0
    %1168 = vmatprep.subr.mxu0 0.0
    %1169 = vmatpush1.msra.mxu0 0.0
    %1170 = vmatprep.subr.mxu0 0.0
    %1171 = vmatpush1.msra.mxu0 0.0
    %1172 = vmatprep.subr.mxu0 0.0
    %1173 = vmatpush1.msra.mxu0 0.0
    %1174 = vmatprep.subr.mxu0 0.0
    %1175 = vmatpush1.msra.mxu0 %v255
    %1176 = vmatprep.subr.mxu0 0.0
    %1177 = vmatpush1.msra.mxu0 %v254
    %1178 = vmatprep.subr.mxu0 0.0
    %1179 = vmatpush2.msra.mxu0 0.0
    %1180 = vmatprep.subr.mxu0 0.0
    %1181 = vmatpush2.msra.mxu0 0.0
    %1182 = vmatprep.subr.mxu0 0.0
    %1183 = vmatpush2.msra.mxu0 0.0
    %1184 = vmatprep.subr.mxu0 0.0
    %1185 = vmatpush2.msra.mxu0 0.0
    %1186 = vmatprep.subr.mxu0 0.0
    %1187 = vmatpush2.msra.mxu0 0.0
    %1188 = vmatprep.subr.mxu0 0.0
    %1189 = vmatpush2.msra.mxu0 0.0
    %1190 = vmatprep.subr.mxu0 0.0
    %1191 = vmatpush2.msra.mxu0 0.0
    %1192 = vmatprep.subr.mxu0 0.0
    %1193 = vmatpush2.msra.mxu0 0.0
    %1194 = vmatprep.subr.mxu0 0.0
    %1195 = vmatpush2.msra.mxu0 0.0
    %1196 = vmatprep.subr.mxu0 0.0
    %1197 = vmatpush2.msra.mxu0 0.0
    %1198 = vmatprep.subr.mxu0 0.0
    %1199 = vmatpush2.msra.mxu0 0.0
    %1200 = vmatprep.subr.mxu0 0.0
    %1201 = vmatpush2.msra.mxu0 0.0
    %1202 = vmatprep.subr.mxu0 0.0
    %1203 = vmatpush2.msra.mxu0 0.0
    %1204 = vmatprep.subr.mxu0 0.0
    %1205 = vmatpush2.msra.mxu0 0.0
    %1206 = vmatprep.subr.mxu0 0.0
    %1207 = vmatpush2.msra.mxu0 0.0
    %1208 = vmatprep.subr.mxu0 0.0
    %1209 = vmatpush2.msra.mxu0 0.0
    %1210 = vmatprep.mubr.f32.mxu0 0.0
    %1211 = vmatmul.mubr.f32.gmra.mxu0 %v1144
    %v1212 = vpop.f32.mrf.mxu0
    %v1213 = vadd.f32 %v1140, %v1212
    %v1214 = vpop.f32.mrf.mxu0
    %1215 = vdwg.mxu0
    %1216 = vst [vmem:[#allocation13 + $0x8] sm:$0xff] %v1213
    // Predicated region
    $region50: #{tpu_custom_call.1} parent=1 // pred_check
      _
    $region51: #{tpu_custom_call.1} parent=1 // pred_check_branch
      %1218 = sbr.rel (0) target = $region53
    $region52: #{tpu_custom_call.1} parent=1 // pred_region
      %s1220 = ssub.s32 256, 256
      %1221 = vsyncadd [#allocation4], %s1220
      %s1222 = sshll.u32 [#allocation13], 4
      %s1223 = int_to_ptr.vmem [resolvable:$true] %s1222
      %1228 = dma.vmem_to_hbm [thread:$0]  %s1223, 256, %s6, [#allocation4], 128, 128, 8
    $region53: #{tpu_custom_call.1} parent=1 // pred_fallthru
      _
    // Predicated region
    $region54: #{tpu_custom_call.1} parent=1 // pred_check
      _
    $region55: #{tpu_custom_call.1} parent=1 // pred_check_branch
      %1230 = sbr.rel (0) target = $region57
    $region56: #{tpu_custom_call.1} parent=1 // pred_region
      %1231 = dma.done [#allocation4], 256
    $region57: #{tpu_custom_call.1} parent=1 // pred_fallthru
      _
    %1232 = vsyncpa [#allocation3], 1
    %1233 = vsyncpa [#allocation6], 1
    %1234 = vsyncpa [#allocation9], 1
    %1235 = vsyncpa [#allocation12], 1
    %1236 = vsyncpa [#allocation4], 1

</llo_original>
